<compile_context>
chip_gen: v7x
topology: tpu7x:2x2x1
jax: 0.10.0
libtpu: 0.0.40
codegen_flags: <defaults>
</compile_context>

<pallas_src>
import functools

import jax
import jax.numpy as jnp
from jax import lax
from jax.experimental import pallas as pl
from jax.experimental.pallas import tpu as pltpu


# ----------------------------------------------------------------------------
# Kernel 1: fused [prev-layer BN+ReLU] -> 3x3 conv (pad=1, stride=1, no bias)
#           -> per-batch partial BN statistics.
# ----------------------------------------------------------------------------
def _conv3x3_kernel(x_ref, w_ref, scale_ref, shift_ref,
                    y_ref, ps_ref, pss_ref, pad_ref, *, apply_relu):
    # x_ref     : (1, H, W, Cin)   previous layer's *pre-BN* output (or input)
    # w_ref     : (9*Cin, Cout)    taps flattened as ((kh*3 + kw)*Cin + ci)
    # scale_ref : (1, 1, Cin)      folded BN scale of previous layer (or 1)
    # shift_ref : (1, 1, Cin)      folded BN shift of previous layer (or 0)
    # y_ref     : (1, H*W, Cout)   this layer's pre-BN output
    # ps_ref    : (1, 1, Cout)     per-batch partial sum over (H, W)
    # pss_ref   : (1, 1, Cout)     per-batch partial sum of squares
    # pad_ref   : (H+2, W+2, Cin)  VMEM scratch holding the zero-padded tile
    H, W, Cin = x_ref.shape[1], x_ref.shape[2], x_ref.shape[3]

    # Previous layer's BN (+ReLU) fused into the load path.
    xin = x_ref[0] * scale_ref[0, 0, :] + shift_ref[0, 0, :]
    if apply_relu:
        xin = jnp.maximum(xin, 0.0)

    # Halo handled in VMEM: zero the scratch, write the interior.  No HBM pad.
    pad_ref[...] = jnp.zeros_like(pad_ref)
    pad_ref[1:H + 1, 1:W + 1, :] = xin

    # im2col -> a single (H*W, 9*Cin) x (9*Cin, Cout) MXU matmul.
    patch = jnp.concatenate(
        [pad_ref[kh:kh + H, kw:kw + W, :].reshape(H * W, Cin)
         for kh in range(3) for kw in range(3)],
        axis=-1)
    acc = jnp.dot(patch, w_ref[...], preferred_element_type=jnp.float32)

    y_ref[0] = acc
    # Per-batch partial stats (reduced in the wrapper) keep the grid "parallel".
    ps_ref[0] = jnp.sum(acc, axis=0, keepdims=True)
    pss_ref[0] = jnp.sum(acc * acc, axis=0, keepdims=True)


def conv3x3_fused(x_nhwc, w_flat, scale, shift, apply_relu):
    """Fused prev-BN/ReLU + 3x3 conv.  Returns (y_preBN, per-batch sum/sumsq)."""
    N, H, W, Cin = x_nhwc.shape
    Cout = w_flat.shape[-1]
    kern = functools.partial(_conv3x3_kernel, apply_relu=apply_relu)
    y, ps, pss = pl.pallas_call(
        kern,
        grid=(N,),
        in_specs=[
            pl.BlockSpec((1, H, W, Cin), lambda n: (n, 0, 0, 0)),
            pl.BlockSpec((9 * Cin, Cout), lambda n: (0, 0)),
            pl.BlockSpec((1, 1, Cin), lambda n: (0, 0, 0)),
            pl.BlockSpec((1, 1, Cin), lambda n: (0, 0, 0)),
        ],
        out_specs=[
            pl.BlockSpec((1, H * W, Cout), lambda n: (n, 0, 0)),
            pl.BlockSpec((1, 1, Cout), lambda n: (n, 0, 0)),
            pl.BlockSpec((1, 1, Cout), lambda n: (n, 0, 0)),
        ],
        out_shape=[
            jax.ShapeDtypeStruct((N, H * W, Cout), jnp.float32),
            jax.ShapeDtypeStruct((N, 1, Cout), jnp.float32),
            jax.ShapeDtypeStruct((N, 1, Cout), jnp.float32),
        ],
        scratch_shapes=[pltpu.VMEM((H + 2, W + 2, Cin), jnp.float32)],
        compiler_params=pltpu.CompilerParams(
            dimension_semantics=("parallel",)),
    )(x_nhwc, w_flat, scale.reshape(1, 1, Cin), shift.reshape(1, 1, Cin))
    return y.reshape(N, H, W, Cout), ps, pss


# ----------------------------------------------------------------------------
# Kernel 2: fused [last-layer BN + ReLU] + 2x2 max pool (stride 2).
# Input is presented as (N, H, W//2, 2*C) — an order-preserving metadata
# reshape of (N, H, W, C), so the w-pair sits in the lane dimension.
# ----------------------------------------------------------------------------
def _bn_relu_pool_kernel(y_ref, scale_ref, shift_ref, o_ref):
    # y_ref            : (1, H, W//2, 2*C)   pre-BN conv output
    # scale_ref/shift  : (1, 1, 2*C)         BN affine tiled x2 over the w-pair
    # o_ref            : (1, H//2, W//2, C)
    H, Wh = y_ref.shape[1], y_ref.shape[2]
    C = o_ref.shape[3]
    v = jnp.maximum(y_ref[0] * scale_ref[0, 0, :] + shift_ref[0, 0, :], 0.0)
    cmax = jnp.maximum(v[:, :, :C], v[:, :, C:])      # pool over column pairs
    cmax = cmax.reshape(H // 2, 2, Wh, C)             # split leading dim (free)
    o_ref[0] = jnp.maximum(cmax[:, 0], cmax[:, 1])    # pool over row pairs


# ----------------------------------------------------------------------------
# Full forward pass.
# ----------------------------------------------------------------------------
def cascade_conv_block(x_nchw, conv_w_flat, bn_gammas, bn_betas, eps=1e-5):
    x = jnp.transpose(x_nchw, (0, 2, 3, 1)).astype(jnp.float32)   # NCHW -> NHWC
    N, H, W, _ = x.shape

    # (scale, shift) of the *previous* layer's BN; identity for the first conv.
    scale = jnp.ones((x.shape[-1],), jnp.float32)
    shift = jnp.zeros((x.shape[-1],), jnp.float32)
    apply_relu = False

    y = x
    for w_flat, gamma, beta in zip(conv_w_flat, bn_gammas, bn_betas):
        y, ps, pss = conv3x3_fused(y, w_flat, scale, shift, apply_relu)
        C = y.shape[-1]
        cnt = float(N * H * W)
        s = jnp.sum(ps, axis=0)[0]                    # (C,)
        ss = jnp.sum(pss, axis=0)[0]                  # (C,)
        mean = s / cnt
        # NOTE: E[x^2]-E[x]^2 in f32; fine at these scales (see review note).
        var = ss / cnt - mean * mean                  # biased var (BN training)
        inv = lax.rsqrt(var + eps)
        scale = gamma * inv
        shift = beta - mean * gamma * inv
        apply_relu = True

    # Fused last-layer BN+ReLU + 2x2/2 maxpool.
    C = y.shape[-1]
    y2 = y.reshape(N, H, W // 2, 2 * C)               # metadata-only reshape
    scale2 = jnp.tile(scale, 2).reshape(1, 1, 2 * C)
    shift2 = jnp.tile(shift, 2).reshape(1, 1, 2 * C)
    out = pl.pallas_call(
        _bn_relu_pool_kernel,
        grid=(N,),
        in_specs=[
            pl.BlockSpec((1, H, W // 2, 2 * C), lambda n: (n, 0, 0, 0)),
            pl.BlockSpec((1, 1, 2 * C), lambda n: (0, 0, 0)),
            pl.BlockSpec((1, 1, 2 * C), lambda n: (0, 0, 0)),
        ],
        out_specs=pl.BlockSpec((1, H // 2, W // 2, C), lambda n: (n, 0, 0, 0)),
        out_shape=jax.ShapeDtypeStruct((N, H // 2, W // 2, C), jnp.float32),
        compiler_params=pltpu.CompilerParams(
            dimension_semantics=("parallel",)),
    )(y2, scale2, shift2)

    return jnp.transpose(out, (0, 3, 1, 2))           # NHWC -> NCHW


# ----------------------------------------------------------------------------
# Deterministic parameter init (shapes from the PyTorch __init__).
# ----------------------------------------------------------------------------
def init_params(key, cascade_depth, in_planes, planes):
    w_oihw, w_flats, gammas, betas = [], [], [], []
    cin = in_planes
    for _ in range(cascade_depth):
        key, sub = jax.random.split(key)
        fan_in = cin * 9
        w = jax.random.normal(sub, (planes, cin, 3, 3), jnp.float32) / jnp.sqrt(fan_in)
        w_oihw.append(w)
        # OIHW -> (kh, kw, Cin, Cout) -> (9*Cin, Cout); row order matches the
        # in-kernel im2col concat order: (kh, kw, ci).
        w_flats.append(jnp.transpose(w, (2, 3, 1, 0)).reshape(9 * cin, planes))
        gammas.append(jnp.ones((planes,), jnp.float32))
        betas.append(jnp.zeros((planes,), jnp.float32))
        cin = planes
    return w_oihw, w_flats, gammas, betas


# Pure-JAX reference (NCHW, mirrors the PyTorch forward) for self-check.
def ref_forward(x, w_oihw, gammas, betas, eps=1e-5):
    for w, g, b in zip(w_oihw, gammas, betas):
        x = lax.conv_general_dilated(x, w, (1, 1), 'SAME',
                                     dimension_numbers=('NCHW', 'OIHW', 'NCHW'))
        mean = x.mean(axis=(0, 2, 3), keepdims=True)
        var = x.var(axis=(0, 2, 3), keepdims=True)
        xh = (x - mean) * lax.rsqrt(var + eps)
        x = jnp.maximum(xh * g.reshape(1, -1, 1, 1) + b.reshape(1, -1, 1, 1), 0.0)
    N, C, H, W = x.shape
    return x.reshape(N, C, H // 2, 2, W // 2, 2).max(axis=(3, 5))


if __name__ == "__main__":
    key = jax.random.PRNGKey(0)
    N, Cin, H, W = 2, 4, 16, 16
    planes, cascade_depth = 8, 2

    key, kx = jax.random.split(key)
    x = jax.random.normal(kx, (N, Cin, H, W), jnp.float32)
    w_oihw, w_flats, gammas, betas = init_params(key, cascade_depth, Cin, planes)

    out = cascade_conv_block(x, w_flats, gammas, betas)
    out = jax.block_until_ready(out)

    ref = ref_forward(x, w_oihw, gammas, betas)
    assert out.shape == ref.shape == (N, planes, H // 2, W // 2)
    assert jnp.allclose(out, ref, atol=1e-3, rtol=1e-3), float(
        jnp.max(jnp.abs(out - ref)))
    print("KERNEL_OK")
</pallas_src>

<mosaic_0001>
module attributes {stable_mosaic.version = 11 : i64} {
  func.func @_conv3x3_kernel(%arg0: i32, %arg1: memref<1x16x16x4xf32, #tpu.memory_space<vmem>>, %arg2: memref<36x8xf32, #tpu.memory_space<vmem>>, %arg3: memref<1x1x4xf32, #tpu.memory_space<vmem>>, %arg4: memref<1x1x4xf32, #tpu.memory_space<vmem>>, %arg5: memref<1x256x8xf32, #tpu.memory_space<vmem>>, %arg6: memref<1x1x8xf32, #tpu.memory_space<vmem>>, %arg7: memref<1x1x8xf32, #tpu.memory_space<vmem>>, %arg8: memref<18x18x4xf32, #tpu.memory_space<vmem>>) attributes {dimension_semantics = [#tpu.dimension_semantics<parallel>], iteration_bounds = array<i64: 2>, scalar_prefetch = 0 : i64, scratch_operands = 1 : i64, tpu.core_type = #tpu.core_type<tc>, window_params = [{transform_indices = @transform_0, window_bounds = array<i64: 1, 16, 16, 4>}, {pipeline_mode = #tpu.pipeline_mode<synchronous>, transform_indices = @transform_1, window_bounds = array<i64: 36, 8>}, {pipeline_mode = #tpu.pipeline_mode<synchronous>, transform_indices = @transform_2, window_bounds = array<i64: 1, 1, 4>}, {pipeline_mode = #tpu.pipeline_mode<synchronous>, transform_indices = @transform_3, window_bounds = array<i64: 1, 1, 4>}, {transform_indices = @transform_4, window_bounds = array<i64: 1, 256, 8>}, {transform_indices = @transform_5, window_bounds = array<i64: 1, 1, 8>}, {transform_indices = @transform_6, window_bounds = array<i64: 1, 1, 8>}]} {
    %c0 = arith.constant 0 : index
    %c0_0 = arith.constant 0 : index
    %c0_1 = arith.constant 0 : index
    %c0_2 = arith.constant 0 : index
    %0 = vector.load %arg1[%c0, %c0_0, %c0_1, %c0_2] : memref<1x16x16x4xf32, #tpu.memory_space<vmem>>, vector<1x16x16x4xf32>
    %1 = vector.shape_cast %0 : vector<1x16x16x4xf32> to vector<16x16x4xf32>
    %c0_3 = arith.constant 0 : index
    %c0_4 = arith.constant 0 : index
    %c0_5 = arith.constant 0 : index
    %2 = vector.load %arg3[%c0_3, %c0_4, %c0_5] : memref<1x1x4xf32, #tpu.memory_space<vmem>>, vector<1x1x4xf32>
    %3 = vector.shape_cast %2 : vector<1x1x4xf32> to vector<4xf32>
    %4 = vector.shape_cast %3 : vector<4xf32> to vector<1x1x4xf32>
    %5 = vector.broadcast %4 : vector<1x1x4xf32> to vector<16x16x4xf32>
    %6 = arith.mulf %1, %5 : vector<16x16x4xf32>
    %c0_6 = arith.constant 0 : index
    %c0_7 = arith.constant 0 : index
    %c0_8 = arith.constant 0 : index
    %7 = vector.load %arg4[%c0_6, %c0_7, %c0_8] : memref<1x1x4xf32, #tpu.memory_space<vmem>>, vector<1x1x4xf32>
    %8 = vector.shape_cast %7 : vector<1x1x4xf32> to vector<4xf32>
    %9 = vector.shape_cast %8 : vector<4xf32> to vector<1x1x4xf32>
    %10 = vector.broadcast %9 : vector<1x1x4xf32> to vector<16x16x4xf32>
    %11 = arith.addf %6, %10 : vector<16x16x4xf32>
    %cst = arith.constant 0.000000e+00 : f32
    %12 = vector.broadcast %cst : f32 to vector<18x18x4xf32>
    %c0_9 = arith.constant 0 : index
    %c0_10 = arith.constant 0 : index
    %c0_11 = arith.constant 0 : index
    %13 = vector.load %arg8[%c0_9, %c0_10, %c0_11] : memref<18x18x4xf32, #tpu.memory_space<vmem>>, vector<18x18x4xf32>
    tpu.vector_store %arg8[%c0_9, %c0_10, %c0_11], %12 {strides = array<i32>} : memref<18x18x4xf32, #tpu.memory_space<vmem>>, vector<18x18x4xf32>,
    %c1 = arith.constant 1 : index
    %c1_12 = arith.constant 1 : index
    %c0_13 = arith.constant 0 : index
    %14 = vector.load %arg8[%c1, %c1_12, %c0_13] : memref<18x18x4xf32, #tpu.memory_space<vmem>>, vector<16x16x4xf32>
    tpu.vector_store %arg8[%c1, %c1_12, %c0_13], %11 {strides = array<i32>} : memref<18x18x4xf32, #tpu.memory_space<vmem>>, vector<16x16x4xf32>,
    %c0_14 = arith.constant 0 : index
    %c0_15 = arith.constant 0 : index
    %c0_16 = arith.constant 0 : index
    %15 = vector.load %arg8[%c0_14, %c0_15, %c0_16] : memref<18x18x4xf32, #tpu.memory_space<vmem>>, vector<16x16x4xf32>
    %16 = vector.shape_cast %15 : vector<16x16x4xf32> to vector<256x4xf32>
    %c0_17 = arith.constant 0 : index
    %c1_18 = arith.constant 1 : index
    %c0_19 = arith.constant 0 : index
    %17 = vector.load %arg8[%c0_17, %c1_18, %c0_19] : memref<18x18x4xf32, #tpu.memory_space<vmem>>, vector<16x16x4xf32>
    %18 = vector.shape_cast %17 : vector<16x16x4xf32> to vector<256x4xf32>
    %c0_20 = arith.constant 0 : index
    %c2 = arith.constant 2 : index
    %c0_21 = arith.constant 0 : index
    %19 = vector.load %arg8[%c0_20, %c2, %c0_21] : memref<18x18x4xf32, #tpu.memory_space<vmem>>, vector<16x16x4xf32>
    %20 = vector.shape_cast %19 : vector<16x16x4xf32> to vector<256x4xf32>
    %c1_22 = arith.constant 1 : index
    %c0_23 = arith.constant 0 : index
    %c0_24 = arith.constant 0 : index
    %21 = vector.load %arg8[%c1_22, %c0_23, %c0_24] : memref<18x18x4xf32, #tpu.memory_space<vmem>>, vector<16x16x4xf32>
    %22 = vector.shape_cast %21 : vector<16x16x4xf32> to vector<256x4xf32>
    %c1_25 = arith.constant 1 : index
    %c1_26 = arith.constant 1 : index
    %c0_27 = arith.constant 0 : index
    %23 = vector.load %arg8[%c1_25, %c1_26, %c0_27] : memref<18x18x4xf32, #tpu.memory_space<vmem>>, vector<16x16x4xf32>
    %24 = vector.shape_cast %23 : vector<16x16x4xf32> to vector<256x4xf32>
    %c1_28 = arith.constant 1 : index
    %c2_29 = arith.constant 2 : index
    %c0_30 = arith.constant 0 : index
    %25 = vector.load %arg8[%c1_28, %c2_29, %c0_30] : memref<18x18x4xf32, #tpu.memory_space<vmem>>, vector<16x16x4xf32>
    %26 = vector.shape_cast %25 : vector<16x16x4xf32> to vector<256x4xf32>
    %c2_31 = arith.constant 2 : index
    %c0_32 = arith.constant 0 : index
    %c0_33 = arith.constant 0 : index
    %27 = vector.load %arg8[%c2_31, %c0_32, %c0_33] : memref<18x18x4xf32, #tpu.memory_space<vmem>>, vector<16x16x4xf32>
    %28 = vector.shape_cast %27 : vector<16x16x4xf32> to vector<256x4xf32>
    %c2_34 = arith.constant 2 : index
    %c1_35 = arith.constant 1 : index
    %c0_36 = arith.constant 0 : index
    %29 = vector.load %arg8[%c2_34, %c1_35, %c0_36] : memref<18x18x4xf32, #tpu.memory_space<vmem>>, vector<16x16x4xf32>
    %30 = vector.shape_cast %29 : vector<16x16x4xf32> to vector<256x4xf32>
    %c2_37 = arith.constant 2 : index
    %c2_38 = arith.constant 2 : index
    %c0_39 = arith.constant 0 : index
    %31 = vector.load %arg8[%c2_37, %c2_38, %c0_39] : memref<18x18x4xf32, #tpu.memory_space<vmem>>, vector<16x16x4xf32>
    %32 = vector.shape_cast %31 : vector<16x16x4xf32> to vector<256x4xf32>
    %33 = tpu.concatenate %16, %18, %20, %22, %24, %26, %28, %30, %32 in 1 : vector<256x4xf32>, vector<256x4xf32>, vector<256x4xf32>, vector<256x4xf32>, vector<256x4xf32>, vector<256x4xf32>, vector<256x4xf32>, vector<256x4xf32>, vector<256x4xf32> -> vector<256x36xf32>
    %c0_40 = arith.constant 0 : index
    %c0_41 = arith.constant 0 : index
    %34 = vector.load %arg2[%c0_40, %c0_41] : memref<36x8xf32, #tpu.memory_space<vmem>>, vector<36x8xf32>
    %cst_42 = arith.constant dense<0.000000e+00> : vector<256x8xf32>
    %35 = tpu.matmul %33, %34, %cst_42 {dimension_numbers = #tpu.dot_dimension_numbers<[1], [0], [0], [1], [0, 0, 1, 1], [], []>} : vector<256x36xf32>, vector<36x8xf32>, vector<256x8xf32> -> vector<256x8xf32>
    %c0_43 = arith.constant 0 : index
    %c0_44 = arith.constant 0 : index
    %c0_45 = arith.constant 0 : index
    %36 = vector.load %arg5[%c0_43, %c0_44, %c0_45] : memref<1x256x8xf32, #tpu.memory_space<vmem>>, vector<1x256x8xf32>
    %37 = vector.shape_cast %36 : vector<1x256x8xf32> to vector<256x8xf32>
    %38 = vector.shape_cast %35 : vector<256x8xf32> to vector<1x256x8xf32>
    tpu.vector_store %arg5[%c0_43, %c0_44, %c0_45], %38 {strides = array<i32>} : memref<1x256x8xf32, #tpu.memory_space<vmem>>, vector<1x256x8xf32>,
    %cst_46 = arith.constant dense<0.000000e+00> : vector<8xf32>
    %39 = vector.multi_reduction <add>, %35, %cst_46 [0] : vector<256x8xf32> to vector<8xf32>
    %40 = vector.shape_cast %39 : vector<8xf32> to vector<1x8xf32>
    %c0_47 = arith.constant 0 : index
    %c0_48 = arith.constant 0 : index
    %c0_49 = arith.constant 0 : index
    %41 = vector.load %arg6[%c0_47, %c0_48, %c0_49] : memref<1x1x8xf32, #tpu.memory_space<vmem>>, vector<1x1x8xf32>
    %42 = vector.shape_cast %41 : vector<1x1x8xf32> to vector<1x8xf32>
    %43 = vector.shape_cast %40 : vector<1x8xf32> to vector<1x1x8xf32>
    tpu.vector_store %arg6[%c0_47, %c0_48, %c0_49], %43 {strides = array<i32>} : memref<1x1x8xf32, #tpu.memory_space<vmem>>, vector<1x1x8xf32>,
    %44 = arith.mulf %35, %35 : vector<256x8xf32>
    %cst_50 = arith.constant dense<0.000000e+00> : vector<8xf32>
    %45 = vector.multi_reduction <add>, %44, %cst_50 [0] : vector<256x8xf32> to vector<8xf32>
    %46 = vector.shape_cast %45 : vector<8xf32> to vector<1x8xf32>
    %c0_51 = arith.constant 0 : index
    %c0_52 = arith.constant 0 : index
    %c0_53 = arith.constant 0 : index
    %47 = vector.load %arg7[%c0_51, %c0_52, %c0_53] : memref<1x1x8xf32, #tpu.memory_space<vmem>>, vector<1x1x8xf32>
    %48 = vector.shape_cast %47 : vector<1x1x8xf32> to vector<1x8xf32>
    %49 = vector.shape_cast %46 : vector<1x8xf32> to vector<1x1x8xf32>
    tpu.vector_store %arg7[%c0_51, %c0_52, %c0_53], %49 {strides = array<i32>} : memref<1x1x8xf32, #tpu.memory_space<vmem>>, vector<1x1x8xf32>,
    return
  }
  func.func @transform_0(%arg0: i32) -> (i32, i32, i32, i32) {
    %c0_i32 = arith.constant 0 : i32
    %c0_i32_0 = arith.constant 0 : i32
    %c0_i32_1 = arith.constant 0 : i32
    %c0_i32_2 = arith.constant 0 : i32
    return %arg0, %c0_i32, %c0_i32_0, %c0_i32_1 : i32, i32, i32, i32
  }
  func.func @transform_1(%arg0: i32) -> (i32, i32) {
    %c0_i32 = arith.constant 0 : i32
    %c0_i32_0 = arith.constant 0 : i32
    %c0_i32_1 = arith.constant 0 : i32
    return %c0_i32, %c0_i32_0 : i32, i32
  }
  func.func @transform_2(%arg0: i32) -> (i32, i32, i32) {
    %c0_i32 = arith.constant 0 : i32
    %c0_i32_0 = arith.constant 0 : i32
    %c0_i32_1 = arith.constant 0 : i32
    %c0_i32_2 = arith.constant 0 : i32
    return %c0_i32, %c0_i32_0, %c0_i32_1 : i32, i32, i32
  }
  func.func @transform_3(%arg0: i32) -> (i32, i32, i32) {
    %c0_i32 = arith.constant 0 : i32
    %c0_i32_0 = arith.constant 0 : i32
    %c0_i32_1 = arith.constant 0 : i32
    %c0_i32_2 = arith.constant 0 : i32
    return %c0_i32, %c0_i32_0, %c0_i32_1 : i32, i32, i32
  }
  func.func @transform_4(%arg0: i32) -> (i32, i32, i32) {
    %c0_i32 = arith.constant 0 : i32
    %c0_i32_0 = arith.constant 0 : i32
    %c0_i32_1 = arith.constant 0 : i32
    return %arg0, %c0_i32, %c0_i32_0 : i32, i32, i32
  }
  func.func @transform_5(%arg0: i32) -> (i32, i32, i32) {
    %c0_i32 = arith.constant 0 : i32
    %c0_i32_0 = arith.constant 0 : i32
    %c0_i32_1 = arith.constant 0 : i32
    return %arg0, %c0_i32, %c0_i32_0 : i32, i32, i32
  }
  func.func @transform_6(%arg0: i32) -> (i32, i32, i32) {
    %c0_i32 = arith.constant 0 : i32
    %c0_i32_0 = arith.constant 0 : i32
    %c0_i32_1 = arith.constant 0 : i32
    return %arg0, %c0_i32, %c0_i32_0 : i32, i32, i32
  }
}

</mosaic_0001>

<llo_original>
// kernel: tpu_custom_call.1
$region0: #{tpu_custom_call.1}
  #allocation0 [shape = 'u32[]', space=smem, size = 0x4, offset = 0x4, fixed_abs, tag = 'smem constant byte address 0x4 - core index']
  #allocation1 [shape = 'u32[144,128]{1,0:T(1,128)}', space=vmem, size = 0x12000, scoped, tag = 'internal scratch']
  #allocation2 [shape = 'f32[18,18,4]{2,1,0:T(8,128)}', space=vmem, size = 0x36000, scoped, tag = 'scratch operand']
  %s0 = inlined_call_operand.vmem [shape: f32[2,16,16,4], index: 0, kind: input, shape index: {}]
  %s1 = inlined_call_operand.vmem [shape: f32[36,8], index: 1, kind: input, shape index: {}]
  %s2 = inlined_call_operand.vmem [shape: f32[1,1,4], index: 2, kind: input, shape index: {}]
  %s3 = inlined_call_operand.vmem [shape: f32[1,1,4], index: 3, kind: input, shape index: {}]
  %s4 = inlined_call_operand.vmem [shape: f32[2,256,8], index: 4, kind: output, shape index: {0}]
  %s5 = inlined_call_operand.hbm [shape: f32[2,1,8], index: 5, kind: output, shape index: {1}]
  %s6 = inlined_call_operand.hbm [shape: f32[2,1,8], index: 6, kind: output, shape index: {2}]
  %7 = xla_tuple %s4, %s5, %s6
  %s8 = sld [smem:[#allocation0]]
  $region65: #{tpu_custom_call.1} parent=0
    _
  %s10 = ssub.s32 1, %s8
  %s11 = scalar_select 0, %s10, %s8
  $region1: #{tpu_custom_call.1} parent=0
    #allocation3 [shape = 'u8[1024]{0}', space=vmem, size = 0x400, scoped, tag = 'output window, operand 1']
    #allocation4 [shape = 's32[2]{0}', space=sflag, size = 0x8, scoped, tag = 'scoped memory for tpu_custom_call.1']
    #allocation5 [shape = 'u8[1024]{0}', space=vmem, size = 0x400, scoped, tag = 'output window, operand 2']
    #allocation6 [shape = 's32[2]{0}', space=sflag, size = 0x8, scoped, tag = 'scoped memory for tpu_custom_call.1']
    %12 = vsyncpa [#allocation4], 0
    %s13 = scalar_lea.sflag [#allocation4], 1
    %14 = vsyncpa %s13, 0
    %15 = vsyncpa [#allocation6], 0
    %s16 = scalar_lea.sflag [#allocation6], 1
    %17 = vsyncpa %s16, 0
    loop: start=0, step=1, limit=4
    $region2: #{tpu_custom_call.1} parent=1 // loop_pre_header
      _
    $region3: #{tpu_custom_call.1} parent=1 // loop_header
      %s19 = sphi 0, %s23
      %p20 = scmp.ge.s32.totalorder %s19, 4
      %s29 = sphi 0, %s31
      %s32 = sphi 0, %s29
      %s33 = sphi 0, %s32
      %s49 = sphi 0, %s33
      %s53 = sphi 0, %s53
      %s55 = sphi 0, %s53
      %s56 = sphi 0, %s55
      %s70 = sphi 0, %s56
      %s74 = sphi 0, %s74
      %s76 = sphi 0, %s74
      %s77 = sphi 0, %s76
      %s91 = sphi 0, %s77
      %s95 = sphi 0, %s95
      %s97 = sphi 0, %s95
      %s98 = sphi 0, %s97
      %s112 = sphi 0, %s98
      %s118 = sphi 0, %s120
      %s121 = sphi 0, %s118
      %s122 = sphi 0, %s121
      %s138 = sphi 0, %s122
      %s144 = sphi 0, %s146
      %s147 = sphi 0, %s144
      %s148 = sphi 0, %s147
      %s164 = sphi 0, %s148
      %s170 = sphi 0, %s172
      %s173 = sphi 0, %s170
      %s174 = sphi 0, %s173
      %s190 = sphi 0, %s174
    $region4: #{tpu_custom_call.1} parent=1 // loop_header_branch
      %22 = sbr.rel (%p20) target = $region8
    $region5: #{tpu_custom_call.1} parent=1 // loop_body
      %s24 = ssub.s32 %s19, 1
      %s25 = ssub.s32 %s19, 2
      %s26 = sadd.s32 %s19, 1
      %s27 = ssub.s32 %s19, %s26
      %p28 = scmp.eq.s32.totalorder %s27, 0
      %s30 = sadd.s32 %s29, 1
      %s31 = scalar_select %p28, %s29, %s30
      %p34 = pneg %p28
      %p35 = scmp.eq.s32.totalorder %s19, 1
      %p36 = por %p34, %p35
      %p37 = scmp.ne.s32.totalorder %s29, %s32
      %p38 = scmp.eq.s32.totalorder %s19, 0
      %p39 = por %p37, %p38
      %p40 = scmp.ne.s32.totalorder %s29, %s32
      %p41 = scmp.eq.s32.totalorder %s24, 1
      %p42 = por %p40, %p41
      %p43 = scmp.ne.s32.totalorder %s32, %s33
      %p44 = scmp.eq.s32.totalorder %s24, 0
      %p45 = por %p43, %p44
      %p46 = scmp.ne.s32.totalorder %s32, %s33
      %p47 = scmp.eq.s32.totalorder %s25, 1
      %p48 = por %p46, %p47
      %p50 = scmp.ne.s32.totalorder %s33, %s49
      %p51 = scmp.eq.s32.totalorder %s25, 0
      %p52 = por %p50, %p51
      %s54 = sadd.s32 %s53, 1
      %p57 = scmp.eq.s32.totalorder %s19, 1
      %p58 = scmp.ne.s32.totalorder %s53, %s55
      %p59 = scmp.eq.s32.totalorder %s19, 0
      %p60 = por %p58, %p59
      %p61 = scmp.ne.s32.totalorder %s53, %s55
      %p62 = scmp.eq.s32.totalorder %s24, 1
      %p63 = por %p61, %p62
      %p64 = scmp.ne.s32.totalorder %s55, %s56
      %p65 = scmp.eq.s32.totalorder %s24, 0
      %p66 = por %p64, %p65
      %p67 = scmp.ne.s32.totalorder %s55, %s56
      %p68 = scmp.eq.s32.totalorder %s25, 1
      %p69 = por %p67, %p68
      %p71 = scmp.ne.s32.totalorder %s56, %s70
      %p72 = scmp.eq.s32.totalorder %s25, 0
      %p73 = por %p71, %p72
      %s75 = sadd.s32 %s74, 1
      %p78 = scmp.eq.s32.totalorder %s19, 1
      %p79 = scmp.ne.s32.totalorder %s74, %s76
      %p80 = scmp.eq.s32.totalorder %s19, 0
      %p81 = por %p79, %p80
      %p82 = scmp.ne.s32.totalorder %s74, %s76
      %p83 = scmp.eq.s32.totalorder %s24, 1
      %p84 = por %p82, %p83
      %p85 = scmp.ne.s32.totalorder %s76, %s77
      %p86 = scmp.eq.s32.totalorder %s24, 0
      %p87 = por %p85, %p86
      %p88 = scmp.ne.s32.totalorder %s76, %s77
      %p89 = scmp.eq.s32.totalorder %s25, 1
      %p90 = por %p88, %p89
      %p92 = scmp.ne.s32.totalorder %s77, %s91
      %p93 = scmp.eq.s32.totalorder %s25, 0
      %p94 = por %p92, %p93
      %s96 = sadd.s32 %s95, 1
      %p99 = scmp.eq.s32.totalorder %s19, 1
      %p100 = scmp.ne.s32.totalorder %s95, %s97
      %p101 = scmp.eq.s32.totalorder %s19, 0
      %p102 = por %p100, %p101
      %p103 = scmp.ne.s32.totalorder %s95, %s97
      %p104 = scmp.eq.s32.totalorder %s24, 1
      %p105 = por %p103, %p104
      %p106 = scmp.ne.s32.totalorder %s97, %s98
      %p107 = scmp.eq.s32.totalorder %s24, 0
      %p108 = por %p106, %p107
      %p109 = scmp.ne.s32.totalorder %s97, %s98
      %p110 = scmp.eq.s32.totalorder %s25, 1
      %p111 = por %p109, %p110
      %p113 = scmp.ne.s32.totalorder %s98, %s112
      %p114 = scmp.eq.s32.totalorder %s25, 0
      %p115 = por %p113, %p114
      %s116 = ssub.s32 %s19, %s26
      %p117 = scmp.eq.s32.totalorder %s116, 0
      %s119 = sadd.s32 %s118, 1
      %s120 = scalar_select %p117, %s118, %s119
      %p123 = pneg %p117
      %p124 = scmp.eq.s32.totalorder %s19, 1
      %p125 = por %p123, %p124
      %p126 = scmp.ne.s32.totalorder %s118, %s121
      %p127 = scmp.eq.s32.totalorder %s19, 0
      %p128 = por %p126, %p127
      %p129 = scmp.ne.s32.totalorder %s118, %s121
      %p130 = scmp.eq.s32.totalorder %s24, 1
      %p131 = por %p129, %p130
      %p132 = scmp.ne.s32.totalorder %s121, %s122
      %p133 = scmp.eq.s32.totalorder %s24, 0
      %p134 = por %p132, %p133
      %p135 = scmp.ne.s32.totalorder %s121, %s122
      %p136 = scmp.eq.s32.totalorder %s25, 1
      %p137 = por %p135, %p136
      %p139 = scmp.ne.s32.totalorder %s122, %s138
      %p140 = scmp.eq.s32.totalorder %s25, 0
      %p141 = por %p139, %p140
      %s142 = ssub.s32 %s19, %s26
      %p143 = scmp.eq.s32.totalorder %s142, 0
      %s145 = sadd.s32 %s144, 1
      %s146 = scalar_select %p143, %s144, %s145
      %p149 = pneg %p143
      %p150 = scmp.eq.s32.totalorder %s19, 1
      %p151 = por %p149, %p150
      %p152 = scmp.ne.s32.totalorder %s144, %s147
      %p153 = scmp.eq.s32.totalorder %s19, 0
      %p154 = por %p152, %p153
      %p155 = scmp.ne.s32.totalorder %s144, %s147
      %p156 = scmp.eq.s32.totalorder %s24, 1
      %p157 = por %p155, %p156
      %p158 = scmp.ne.s32.totalorder %s147, %s148
      %p159 = scmp.eq.s32.totalorder %s24, 0
      %p160 = por %p158, %p159
      %p161 = scmp.ne.s32.totalorder %s147, %s148
      %p162 = scmp.eq.s32.totalorder %s25, 1
      %p163 = por %p161, %p162
      %p165 = scmp.ne.s32.totalorder %s148, %s164
      %p166 = scmp.eq.s32.totalorder %s25, 0
      %p167 = por %p165, %p166
      %s168 = ssub.s32 %s19, %s26
      %p169 = scmp.eq.s32.totalorder %s168, 0
      %s171 = sadd.s32 %s170, 1
      %s172 = scalar_select %p169, %s170, %s171
      %p175 = pneg %p169
      %p176 = scmp.eq.s32.totalorder %s19, 1
      %p177 = por %p175, %p176
      %p178 = scmp.ne.s32.totalorder %s170, %s173
      %p179 = scmp.eq.s32.totalorder %s19, 0
      %p180 = por %p178, %p179
      %p181 = scmp.ne.s32.totalorder %s170, %s173
      %p182 = scmp.eq.s32.totalorder %s24, 1
      %p183 = por %p181, %p182
      %p184 = scmp.ne.s32.totalorder %s173, %s174
      %p185 = scmp.eq.s32.totalorder %s24, 0
      %p186 = por %p184, %p185
      %p187 = scmp.ne.s32.totalorder %s173, %s174
      %p188 = scmp.eq.s32.totalorder %s25, 1
      %p189 = por %p187, %p188
      %p191 = scmp.ne.s32.totalorder %s174, %s190
      %p192 = scmp.eq.s32.totalorder %s25, 0
      %p193 = por %p191, %p192
      %p194 = scmp.le.s32.totalorder 1, %s19
      %p195 = scmp.lt.s32.totalorder %s19, 3
      %p196 = pnand %p194, %p195
      %p197 = pneg %p196
      // Predicated region
      $region9: #{tpu_custom_call.1} parent=5 // pred_check
        _
      $region10: #{tpu_custom_call.1} parent=5 // pred_check_branch
        %199 = sbr.rel (%p196) target = $region12
      $region11: #{tpu_custom_call.1} parent=5 // pred_region
        %s200 = ssub.s32 %s19, 1
        // Predicated region
        $region13: #{tpu_custom_call.1} parent=11 // pred_check
          %p201 = pneg %p66
        $region14: #{tpu_custom_call.1} parent=11 // pred_check_branch
          %203 = sbr.rel (%p201) target = $region16
        $region15: #{tpu_custom_call.1} parent=11 // pred_region
          _
        $region16: #{tpu_custom_call.1} parent=11 // pred_fallthru
          _
        // Predicated region
        $region17: #{tpu_custom_call.1} parent=11 // pred_check
          %p204 = pneg %p87
        $region18: #{tpu_custom_call.1} parent=11 // pred_check_branch
          %206 = sbr.rel (%p204) target = $region20
        $region19: #{tpu_custom_call.1} parent=11 // pred_region
          _
        $region20: #{tpu_custom_call.1} parent=11 // pred_fallthru
          _
        // Predicated region
        $region21: #{tpu_custom_call.1} parent=11 // pred_check
          %p207 = pneg %p108
        $region22: #{tpu_custom_call.1} parent=11 // pred_check_branch
          %209 = sbr.rel (%p207) target = $region24
        $region23: #{tpu_custom_call.1} parent=11 // pred_region
          _
        $region24: #{tpu_custom_call.1} parent=11 // pred_fallthru
          _
      $region12: #{tpu_custom_call.1} parent=5 // pred_fallthru
        _
      %p210 = scmp.lt.s32.totalorder %s19, 2
      // Predicated region
      $region25: #{tpu_custom_call.1} parent=5 // pred_check
        %p211 = pneg %p210
      $region26: #{tpu_custom_call.1} parent=5 // pred_check_branch
        %213 = sbr.rel (%p211) target = $region28
      $region27: #{tpu_custom_call.1} parent=5 // pred_region
        // Predicated region
        $region29: #{tpu_custom_call.1} parent=27 // pred_check
          %p214 = pneg %p39
        $region30: #{tpu_custom_call.1} parent=27 // pred_check_branch
          %216 = sbr.rel (%p214) target = $region32
        $region31: #{tpu_custom_call.1} parent=27 // pred_region
          %p217 = scmp.lt.s32.totalorder %s19, 1
          %s218 = scalar_select %p217, %s19, 1
          %s219 = smul.addr %s218, 32
          %s220 = smul.addr %s219, 8
          %s221 = scalar_lea.vmem %s0, %s220
        $region32: #{tpu_custom_call.1} parent=27 // pred_fallthru
          _
      $region28: #{tpu_custom_call.1} parent=5 // pred_fallthru
        _
      %p222 = scmp.le.s32.totalorder 1, %s19
      %p223 = scmp.lt.s32.totalorder %s19, 3
      %p224 = pnand %p222, %p223
      %p225 = pneg %p224
      // Predicated region
      $region33: #{tpu_custom_call.1} parent=5 // pred_check
        _
      $region34: #{tpu_custom_call.1} parent=5 // pred_check_branch
        %227 = sbr.rel (%p224) target = $region36
      $region35: #{tpu_custom_call.1} parent=5 // pred_region
        %s228 = ssub.s32 %s19, 1
        %p229 = scmp.lt.s32.totalorder %s24, 1
        %s230 = scalar_select %p229, %s24, 1
        %s231 = smul.addr %s230, 32
        %s232 = smul.addr %s231, 8
        %s233 = scalar_lea.vmem %s0, %s232
        %p234 = pneg %p45
        %p235 = pneg %p42
        %p236 = pneg %p66
        %p237 = pneg %p63
        %p238 = pneg %p87
        %p239 = pneg %p84
        %p240 = pneg %p108
        %p241 = pneg %p105
        %p242 = pneg %p134
        %p243 = pneg %p131
        %p244 = scmp.lt.s32.totalorder %s24, 1
        %s245 = scalar_select %p244, %s24, 1
        %s246 = smul.addr %s245, 32
        %s247 = smul.addr %s246, 8
        %s248 = scalar_lea.vmem %s4, %s247
        %p249 = pneg %p160
        %p250 = pneg %p157
        %s251 = sand.u32 %s147, 1
        %s252 = scalar_lea.sflag [#allocation4], %s251
        %s253 = sand.u32 %s147, 1
        %s254 = scalar_lea.vmem [#allocation3], %s253
        %p255 = pneg %p186
        %p256 = pneg %p183
        %s257 = sand.u32 %s173, 1
        %s258 = scalar_lea.sflag [#allocation6], %s257
        %s259 = sand.u32 %s173, 1
        %s260 = scalar_lea.vmem [#allocation5], %s259
        %p261 = scmp.lt.s32.totalorder %s24, 1
        %s262 = scalar_select %p261, %s24, 1
        %s263 = smul.addr %s262, 32
        %s264 = smul.addr %s263, 8
        %s265 = scalar_lea.vmem %s0, %s264
        %p266 = scmp.lt.s32.totalorder %s24, 1
        %s267 = scalar_select %p266, %s24, 1
        %s268 = smul.addr %s267, 32
        %s269 = smul.addr %s268, 8
        %s270 = scalar_lea.vmem %s4, %s269
        %v271 = vld [vmem:[%s265] sm:$0xff]
        %v272 = vld [vmem:[%s265 + $0x8] sm:$0xff]
        %v273 = vld [vmem:[%s265 + $0x10] sm:$0xff]
        %v274 = vld [vmem:[%s265 + $0x18] sm:$0xff]
        %v275 = vld [vmem:[%s265 + $0x20] sm:$0xff]
        %v276 = vld [vmem:[%s265 + $0x28] sm:$0xff]
        %v277 = vld [vmem:[%s265 + $0x30] sm:$0xff]
        %v278 = vld [vmem:[%s265 + $0x38] sm:$0xff]
        %v279 = vld [vmem:[%s265 + $0x40] sm:$0xff]
        %v280 = vld [vmem:[%s265 + $0x48] sm:$0xff]
        %v281 = vld [vmem:[%s265 + $0x50] sm:$0xff]
        %v282 = vld [vmem:[%s265 + $0x58] sm:$0xff]
        %v283 = vld [vmem:[%s265 + $0x60] sm:$0xff]
        %v284 = vld [vmem:[%s265 + $0x68] sm:$0xff]
        %v285 = vld [vmem:[%s265 + $0x70] sm:$0xff]
        %v286 = vld [vmem:[%s265 + $0x78] sm:$0xff]
        %v287 = vld [vmem:[%s265 + $0x80] sm:$0xff]
        %v288 = vld [vmem:[%s265 + $0x88] sm:$0xff]
        %v289 = vld [vmem:[%s265 + $0x90] sm:$0xff]
        %v290 = vld [vmem:[%s265 + $0x98] sm:$0xff]
        %v291 = vld [vmem:[%s265 + $0xa0] sm:$0xff]
        %v292 = vld [vmem:[%s265 + $0xa8] sm:$0xff]
        %v293 = vld [vmem:[%s265 + $0xb0] sm:$0xff]
        %v294 = vld [vmem:[%s265 + $0xb8] sm:$0xff]
        %v295 = vld [vmem:[%s265 + $0xc0] sm:$0xff]
        %v296 = vld [vmem:[%s265 + $0xc8] sm:$0xff]
        %v297 = vld [vmem:[%s265 + $0xd0] sm:$0xff]
        %v298 = vld [vmem:[%s265 + $0xd8] sm:$0xff]
        %v299 = vld [vmem:[%s265 + $0xe0] sm:$0xff]
        %v300 = vld [vmem:[%s265 + $0xe8] sm:$0xff]
        %v301 = vld [vmem:[%s265 + $0xf0] sm:$0xff]
        %v302 = vld [vmem:[%s265 + $0xf8] sm:$0xff]
        %v303 = vld [vmem:[%s2] sm:$0x1]
        %v305 = vlaneseq
        %v306 = vshrl.u32 %v305, 7
        %v307 = vsub.s32 0, %v306
        %v308 = vrot.slane %v303, %v307
        %v310 = vmul.f32 %v271, %v308
        %v311 = vmul.f32 %v272, %v308
        %v312 = vmul.f32 %v273, %v308
        %v313 = vmul.f32 %v274, %v308
        %v314 = vmul.f32 %v275, %v308
        %v315 = vmul.f32 %v276, %v308
        %v316 = vmul.f32 %v277, %v308
        %v317 = vmul.f32 %v278, %v308
        %v318 = vmul.f32 %v279, %v308
        %v319 = vmul.f32 %v280, %v308
        %v320 = vmul.f32 %v281, %v308
        %v321 = vmul.f32 %v282, %v308
        %v322 = vmul.f32 %v283, %v308
        %v323 = vmul.f32 %v284, %v308
        %v324 = vmul.f32 %v285, %v308
        %v325 = vmul.f32 %v286, %v308
        %v326 = vmul.f32 %v287, %v308
        %v327 = vmul.f32 %v288, %v308
        %v328 = vmul.f32 %v289, %v308
        %v329 = vmul.f32 %v290, %v308
        %v330 = vmul.f32 %v291, %v308
        %v331 = vmul.f32 %v292, %v308
        %v332 = vmul.f32 %v293, %v308
        %v333 = vmul.f32 %v294, %v308
        %v334 = vmul.f32 %v295, %v308
        %v335 = vmul.f32 %v296, %v308
        %v336 = vmul.f32 %v297, %v308
        %v337 = vmul.f32 %v298, %v308
        %v338 = vmul.f32 %v299, %v308
        %v339 = vmul.f32 %v300, %v308
        %v340 = vmul.f32 %v301, %v308
        %v341 = vmul.f32 %v302, %v308
        %v342 = vld [vmem:[%s3] sm:$0x1]
        %v344 = vlaneseq
        %v345 = vshrl.u32 %v344, 7
        %v346 = vsub.s32 0, %v345
        %v347 = vrot.slane %v342, %v346
        %v349 = vadd.f32 %v310, %v347
        %v350 = vadd.f32 %v311, %v347
        %v351 = vadd.f32 %v312, %v347
        %v352 = vadd.f32 %v313, %v347
        %v353 = vadd.f32 %v314, %v347
        %v354 = vadd.f32 %v315, %v347
        %v355 = vadd.f32 %v316, %v347
        %v356 = vadd.f32 %v317, %v347
        %v357 = vadd.f32 %v318, %v347
        %v358 = vadd.f32 %v319, %v347
        %v359 = vadd.f32 %v320, %v347
        %v360 = vadd.f32 %v321, %v347
        %v361 = vadd.f32 %v322, %v347
        %v362 = vadd.f32 %v323, %v347
        %v363 = vadd.f32 %v324, %v347
        %v364 = vadd.f32 %v325, %v347
        %v365 = vadd.f32 %v326, %v347
        %v366 = vadd.f32 %v327, %v347
        %v367 = vadd.f32 %v328, %v347
        %v368 = vadd.f32 %v329, %v347
        %v369 = vadd.f32 %v330, %v347
        %v370 = vadd.f32 %v331, %v347
        %v371 = vadd.f32 %v332, %v347
        %v372 = vadd.f32 %v333, %v347
        %v373 = vadd.f32 %v334, %v347
        %v374 = vadd.f32 %v335, %v347
        %v375 = vadd.f32 %v336, %v347
        %v376 = vadd.f32 %v337, %v347
        %v377 = vadd.f32 %v338, %v347
        %v378 = vadd.f32 %v339, %v347
        %v379 = vadd.f32 %v340, %v347
        %v380 = vadd.f32 %v341, %v347
        %vm381 = vcmask 31744
        %382 = vst.msk [vmem:[#allocation2] sm:$0xff] %vm381, 0.0
        %383 = vst.msk [vmem:[#allocation2 + $0x8] sm:$0xff] %vm381, 0.0
        %vm384 = vcmask 25600
        %385 = vst.msk [vmem:[#allocation2 + $0x10] sm:$0x3] %vm384, 0.0
        %386 = vst.msk [vmem:[#allocation2 + $0x18] sm:$0xff] %vm381, 0.0
        %387 = vst.msk [vmem:[#allocation2 + $0x20] sm:$0xff] %vm381, 0.0
        %388 = vst.msk [vmem:[#allocation2 + $0x28] sm:$0x3] %vm384, 0.0
        %389 = vst.msk [vmem:[#allocation2 + $0x30] sm:$0xff] %vm381, 0.0
        %390 = vst.msk [vmem:[#allocation2 + $0x38] sm:$0xff] %vm381, 0.0
        %391 = vst.msk [vmem:[#allocation2 + $0x40] sm:$0x3] %vm384, 0.0
        %392 = vst.msk [vmem:[#allocation2 + $0x48] sm:$0xff] %vm381, 0.0
        %393 = vst.msk [vmem:[#allocation2 + $0x50] sm:$0xff] %vm381, 0.0
        %394 = vst.msk [vmem:[#allocation2 + $0x58] sm:$0x3] %vm384, 0.0
        %395 = vst.msk [vmem:[#allocation2 + $0x60] sm:$0xff] %vm381, 0.0
        %396 = vst.msk [vmem:[#allocation2 + $0x68] sm:$0xff] %vm381, 0.0
        %397 = vst.msk [vmem:[#allocation2 + $0x70] sm:$0x3] %vm384, 0.0
        %398 = vst.msk [vmem:[#allocation2 + $0x78] sm:$0xff] %vm381, 0.0
        %399 = vst.msk [vmem:[#allocation2 + $0x80] sm:$0xff] %vm381, 0.0
        %400 = vst.msk [vmem:[#allocation2 + $0x88] sm:$0x3] %vm384, 0.0
        %401 = vst.msk [vmem:[#allocation2 + $0x90] sm:$0xff] %vm381, 0.0
        %402 = vst.msk [vmem:[#allocation2 + $0x98] sm:$0xff] %vm381, 0.0
        %403 = vst.msk [vmem:[#allocation2 + $0xa0] sm:$0x3] %vm384, 0.0
        %404 = vst.msk [vmem:[#allocation2 + $0xa8] sm:$0xff] %vm381, 0.0
        %405 = vst.msk [vmem:[#allocation2 + $0xb0] sm:$0xff] %vm381, 0.0
        %406 = vst.msk [vmem:[#allocation2 + $0xb8] sm:$0x3] %vm384, 0.0
        %407 = vst.msk [vmem:[#allocation2 + $0xc0] sm:$0xff] %vm381, 0.0
        %408 = vst.msk [vmem:[#allocation2 + $0xc8] sm:$0xff] %vm381, 0.0
        %409 = vst.msk [vmem:[#allocation2 + $0xd0] sm:$0x3] %vm384, 0.0
        %410 = vst.msk [vmem:[#allocation2 + $0xd8] sm:$0xff] %vm381, 0.0
        %411 = vst.msk [vmem:[#allocation2 + $0xe0] sm:$0xff] %vm381, 0.0
        %412 = vst.msk [vmem:[#allocation2 + $0xe8] sm:$0x3] %vm384, 0.0
        %413 = vst.msk [vmem:[#allocation2 + $0xf0] sm:$0xff] %vm381, 0.0
        %414 = vst.msk [vmem:[#allocation2 + $0xf8] sm:$0xff] %vm381, 0.0
        %415 = vst.msk [vmem:[#allocation2 + $0x100] sm:$0x3] %vm384, 0.0
        %416 = vst.msk [vmem:[#allocation2 + $0x108] sm:$0xff] %vm381, 0.0
        %417 = vst.msk [vmem:[#allocation2 + $0x110] sm:$0xff] %vm381, 0.0
        %418 = vst.msk [vmem:[#allocation2 + $0x118] sm:$0x3] %vm384, 0.0
        %419 = vst.msk [vmem:[#allocation2 + $0x120] sm:$0xff] %vm381, 0.0
        %420 = vst.msk [vmem:[#allocation2 + $0x128] sm:$0xff] %vm381, 0.0
        %421 = vst.msk [vmem:[#allocation2 + $0x130] sm:$0x3] %vm384, 0.0
        %422 = vst.msk [vmem:[#allocation2 + $0x138] sm:$0xff] %vm381, 0.0
        %423 = vst.msk [vmem:[#allocation2 + $0x140] sm:$0xff] %vm381, 0.0
        %424 = vst.msk [vmem:[#allocation2 + $0x148] sm:$0x3] %vm384, 0.0
        %425 = vst.msk [vmem:[#allocation2 + $0x150] sm:$0xff] %vm381, 0.0
        %426 = vst.msk [vmem:[#allocation2 + $0x158] sm:$0xff] %vm381, 0.0
        %427 = vst.msk [vmem:[#allocation2 + $0x160] sm:$0x3] %vm384, 0.0
        %428 = vst.msk [vmem:[#allocation2 + $0x168] sm:$0xff] %vm381, 0.0
        %429 = vst.msk [vmem:[#allocation2 + $0x170] sm:$0xff] %vm381, 0.0
        %430 = vst.msk [vmem:[#allocation2 + $0x178] sm:$0x3] %vm384, 0.0
        %431 = vst.msk [vmem:[#allocation2 + $0x180] sm:$0xff] %vm381, 0.0
        %432 = vst.msk [vmem:[#allocation2 + $0x188] sm:$0xff] %vm381, 0.0
        %433 = vst.msk [vmem:[#allocation2 + $0x190] sm:$0x3] %vm384, 0.0
        %434 = vst.msk [vmem:[#allocation2 + $0x198] sm:$0xff] %vm381, 0.0
        %435 = vst.msk [vmem:[#allocation2 + $0x1a0] sm:$0xff] %vm381, 0.0
        %436 = vst.msk [vmem:[#allocation2 + $0x1a8] sm:$0x3] %vm384, 0.0
        %s437 = scalar_lea.vmem [#allocation2], 24
        %438 = vst.msk [vmem:[%s437 + $0x1] sm:$0xff] %vm381, %v349
        %439 = vst.msk [vmem:[%s437 + $0x9] sm:$0xff] %vm381, %v350
        %440 = vst.msk [vmem:[%s437 + $0x19] sm:$0xff] %vm381, %v351
        %441 = vst.msk [vmem:[%s437 + $0x21] sm:$0xff] %vm381, %v352
        %442 = vst.msk [vmem:[%s437 + $0x31] sm:$0xff] %vm381, %v353
        %443 = vst.msk [vmem:[%s437 + $0x39] sm:$0xff] %vm381, %v354
        %444 = vst.msk [vmem:[%s437 + $0x49] sm:$0xff] %vm381, %v355
        %445 = vst.msk [vmem:[%s437 + $0x51] sm:$0xff] %vm381, %v356
        %446 = vst.msk [vmem:[%s437 + $0x61] sm:$0xff] %vm381, %v357
        %447 = vst.msk [vmem:[%s437 + $0x69] sm:$0xff] %vm381, %v358
        %448 = vst.msk [vmem:[%s437 + $0x79] sm:$0xff] %vm381, %v359
        %449 = vst.msk [vmem:[%s437 + $0x81] sm:$0xff] %vm381, %v360
        %450 = vst.msk [vmem:[%s437 + $0x91] sm:$0xff] %vm381, %v361
        %451 = vst.msk [vmem:[%s437 + $0x99] sm:$0xff] %vm381, %v362
        %452 = vst.msk [vmem:[%s437 + $0xa9] sm:$0xff] %vm381, %v363
        %453 = vst.msk [vmem:[%s437 + $0xb1] sm:$0xff] %vm381, %v364
        %454 = vst.msk [vmem:[%s437 + $0xc1] sm:$0xff] %vm381, %v365
        %455 = vst.msk [vmem:[%s437 + $0xc9] sm:$0xff] %vm381, %v366
        %456 = vst.msk [vmem:[%s437 + $0xd9] sm:$0xff] %vm381, %v367
        %457 = vst.msk [vmem:[%s437 + $0xe1] sm:$0xff] %vm381, %v368
        %458 = vst.msk [vmem:[%s437 + $0xf1] sm:$0xff] %vm381, %v369
        %459 = vst.msk [vmem:[%s437 + $0xf9] sm:$0xff] %vm381, %v370
        %460 = vst.msk [vmem:[%s437 + $0x109] sm:$0xff] %vm381, %v371
        %461 = vst.msk [vmem:[%s437 + $0x111] sm:$0xff] %vm381, %v372
        %462 = vst.msk [vmem:[%s437 + $0x121] sm:$0xff] %vm381, %v373
        %463 = vst.msk [vmem:[%s437 + $0x129] sm:$0xff] %vm381, %v374
        %464 = vst.msk [vmem:[%s437 + $0x139] sm:$0xff] %vm381, %v375
        %465 = vst.msk [vmem:[%s437 + $0x141] sm:$0xff] %vm381, %v376
        %466 = vst.msk [vmem:[%s437 + $0x151] sm:$0xff] %vm381, %v377
        %467 = vst.msk [vmem:[%s437 + $0x159] sm:$0xff] %vm381, %v378
        %468 = vst.msk [vmem:[%s437 + $0x169] sm:$0xff] %vm381, %v379
        %469 = vst.msk [vmem:[%s437 + $0x171] sm:$0xff] %vm381, %v380
        %v470 = vld [vmem:[#allocation2] sm:$0xff]
        %v471 = vld [vmem:[#allocation2 + $0x8] sm:$0xff]
        %v472 = vld [vmem:[#allocation2 + $0x18] sm:$0xff]
        %v473 = vld [vmem:[#allocation2 + $0x20] sm:$0xff]
        %v474 = vld [vmem:[#allocation2 + $0x30] sm:$0xff]
        %v475 = vld [vmem:[#allocation2 + $0x38] sm:$0xff]
        %v476 = vld [vmem:[#allocation2 + $0x48] sm:$0xff]
        %v477 = vld [vmem:[#allocation2 + $0x50] sm:$0xff]
        %v478 = vld [vmem:[#allocation2 + $0x60] sm:$0xff]
        %v479 = vld [vmem:[#allocation2 + $0x68] sm:$0xff]
        %v480 = vld [vmem:[#allocation2 + $0x78] sm:$0xff]
        %v481 = vld [vmem:[#allocation2 + $0x80] sm:$0xff]
        %v482 = vld [vmem:[#allocation2 + $0x90] sm:$0xff]
        %v483 = vld [vmem:[#allocation2 + $0x98] sm:$0xff]
        %v484 = vld [vmem:[#allocation2 + $0xa8] sm:$0xff]
        %v485 = vld [vmem:[#allocation2 + $0xb0] sm:$0xff]
        %v486 = vld [vmem:[#allocation2 + $0xc0] sm:$0xff]
        %v487 = vld [vmem:[#allocation2 + $0xc8] sm:$0xff]
        %v488 = vld [vmem:[#allocation2 + $0xd8] sm:$0xff]
        %v489 = vld [vmem:[#allocation2 + $0xe0] sm:$0xff]
        %v490 = vld [vmem:[#allocation2 + $0xf0] sm:$0xff]
        %v491 = vld [vmem:[#allocation2 + $0xf8] sm:$0xff]
        %v492 = vld [vmem:[#allocation2 + $0x108] sm:$0xff]
        %v493 = vld [vmem:[#allocation2 + $0x110] sm:$0xff]
        %v494 = vld [vmem:[#allocation2 + $0x120] sm:$0xff]
        %v495 = vld [vmem:[#allocation2 + $0x128] sm:$0xff]
        %v496 = vld [vmem:[#allocation2 + $0x138] sm:$0xff]
        %v497 = vld [vmem:[#allocation2 + $0x140] sm:$0xff]
        %v498 = vld [vmem:[#allocation2 + $0x150] sm:$0xff]
        %v499 = vld [vmem:[#allocation2 + $0x158] sm:$0xff]
        %v500 = vld [vmem:[#allocation2 + $0x168] sm:$0xff]
        %v501 = vld [vmem:[#allocation2 + $0x170] sm:$0xff]
        %v502 = vld [vmem:[#allocation2 + $0x1] sm:$0xff]
        %v503 = vld [vmem:[#allocation2 + $0x9] sm:$0xff]
        %v504 = vld [vmem:[#allocation2 + $0x19] sm:$0xff]
        %v505 = vld [vmem:[#allocation2 + $0x21] sm:$0xff]
        %v506 = vld [vmem:[#allocation2 + $0x31] sm:$0xff]
        %v507 = vld [vmem:[#allocation2 + $0x39] sm:$0xff]
        %v508 = vld [vmem:[#allocation2 + $0x49] sm:$0xff]
        %v509 = vld [vmem:[#allocation2 + $0x51] sm:$0xff]
        %v510 = vld [vmem:[#allocation2 + $0x61] sm:$0xff]
        %v511 = vld [vmem:[#allocation2 + $0x69] sm:$0xff]
        %v512 = vld [vmem:[#allocation2 + $0x79] sm:$0xff]
        %v513 = vld [vmem:[#allocation2 + $0x81] sm:$0xff]
        %v514 = vld [vmem:[#allocation2 + $0x91] sm:$0xff]
        %v515 = vld [vmem:[#allocation2 + $0x99] sm:$0xff]
        %v516 = vld [vmem:[#allocation2 + $0xa9] sm:$0xff]
        %v517 = vld [vmem:[#allocation2 + $0xb1] sm:$0xff]
        %v518 = vld [vmem:[#allocation2 + $0xc1] sm:$0xff]
        %v519 = vld [vmem:[#allocation2 + $0xc9] sm:$0xff]
        %v520 = vld [vmem:[#allocation2 + $0xd9] sm:$0xff]
        %v521 = vld [vmem:[#allocation2 + $0xe1] sm:$0xff]
        %v522 = vld [vmem:[#allocation2 + $0xf1] sm:$0xff]
        %v523 = vld [vmem:[#allocation2 + $0xf9] sm:$0xff]
        %v524 = vld [vmem:[#allocation2 + $0x109] sm:$0xff]
        %v525 = vld [vmem:[#allocation2 + $0x111] sm:$0xff]
        %v526 = vld [vmem:[#allocation2 + $0x121] sm:$0xff]
        %v527 = vld [vmem:[#allocation2 + $0x129] sm:$0xff]
        %v528 = vld [vmem:[#allocation2 + $0x139] sm:$0xff]
        %v529 = vld [vmem:[#allocation2 + $0x141] sm:$0xff]
        %v530 = vld [vmem:[#allocation2 + $0x151] sm:$0xff]
        %v531 = vld [vmem:[#allocation2 + $0x159] sm:$0xff]
        %v532 = vld [vmem:[#allocation2 + $0x169] sm:$0xff]
        %v533 = vld [vmem:[#allocation2 + $0x171] sm:$0xff]
        %v534 = vld [vmem:[#allocation2 + $0x2] sm:$0xff]
        %v535 = vld [vmem:[#allocation2 + $0xa] sm:$0xff]
        %v536 = vld [vmem:[#allocation2 + $0x1a] sm:$0xff]
        %v537 = vld [vmem:[#allocation2 + $0x22] sm:$0xff]
        %v538 = vld [vmem:[#allocation2 + $0x32] sm:$0xff]
        %v539 = vld [vmem:[#allocation2 + $0x3a] sm:$0xff]
        %v540 = vld [vmem:[#allocation2 + $0x4a] sm:$0xff]
        %v541 = vld [vmem:[#allocation2 + $0x52] sm:$0xff]
        %v542 = vld [vmem:[#allocation2 + $0x62] sm:$0xff]
        %v543 = vld [vmem:[#allocation2 + $0x6a] sm:$0xff]
        %v544 = vld [vmem:[#allocation2 + $0x7a] sm:$0xff]
        %v545 = vld [vmem:[#allocation2 + $0x82] sm:$0xff]
        %v546 = vld [vmem:[#allocation2 + $0x92] sm:$0xff]
        %v547 = vld [vmem:[#allocation2 + $0x9a] sm:$0xff]
        %v548 = vld [vmem:[#allocation2 + $0xaa] sm:$0xff]
        %v549 = vld [vmem:[#allocation2 + $0xb2] sm:$0xff]
        %v550 = vld [vmem:[#allocation2 + $0xc2] sm:$0xff]
        %v551 = vld [vmem:[#allocation2 + $0xca] sm:$0xff]
        %v552 = vld [vmem:[#allocation2 + $0xda] sm:$0xff]
        %v553 = vld [vmem:[#allocation2 + $0xe2] sm:$0xff]
        %v554 = vld [vmem:[#allocation2 + $0xf2] sm:$0xff]
        %v555 = vld [vmem:[#allocation2 + $0xfa] sm:$0xff]
        %v556 = vld [vmem:[#allocation2 + $0x10a] sm:$0xff]
        %v557 = vld [vmem:[#allocation2 + $0x112] sm:$0xff]
        %v558 = vld [vmem:[#allocation2 + $0x122] sm:$0xff]
        %v559 = vld [vmem:[#allocation2 + $0x12a] sm:$0xff]
        %v560 = vld [vmem:[#allocation2 + $0x13a] sm:$0xff]
        %v561 = vld [vmem:[#allocation2 + $0x142] sm:$0xff]
        %v562 = vld [vmem:[#allocation2 + $0x152] sm:$0xff]
        %v563 = vld [vmem:[#allocation2 + $0x15a] sm:$0xff]
        %v564 = vld [vmem:[#allocation2 + $0x16a] sm:$0xff]
        %v565 = vld [vmem:[#allocation2 + $0x172] sm:$0xff]
        %v566 = vld [vmem:[%s437] sm:$0xff]
        %v567 = vld [vmem:[%s437 + $0x8] sm:$0xff]
        %v568 = vld [vmem:[%s437 + $0x18] sm:$0xff]
        %v569 = vld [vmem:[%s437 + $0x20] sm:$0xff]
        %v570 = vld [vmem:[%s437 + $0x30] sm:$0xff]
        %v571 = vld [vmem:[%s437 + $0x38] sm:$0xff]
        %v572 = vld [vmem:[%s437 + $0x48] sm:$0xff]
        %v573 = vld [vmem:[%s437 + $0x50] sm:$0xff]
        %v574 = vld [vmem:[%s437 + $0x60] sm:$0xff]
        %v575 = vld [vmem:[%s437 + $0x68] sm:$0xff]
        %v576 = vld [vmem:[%s437 + $0x78] sm:$0xff]
        %v577 = vld [vmem:[%s437 + $0x80] sm:$0xff]
        %v578 = vld [vmem:[%s437 + $0x90] sm:$0xff]
        %v579 = vld [vmem:[%s437 + $0x98] sm:$0xff]
        %v580 = vld [vmem:[%s437 + $0xa8] sm:$0xff]
        %v581 = vld [vmem:[%s437 + $0xb0] sm:$0xff]
        %v582 = vld [vmem:[%s437 + $0xc0] sm:$0xff]
        %v583 = vld [vmem:[%s437 + $0xc8] sm:$0xff]
        %v584 = vld [vmem:[%s437 + $0xd8] sm:$0xff]
        %v585 = vld [vmem:[%s437 + $0xe0] sm:$0xff]
        %v586 = vld [vmem:[%s437 + $0xf0] sm:$0xff]
        %v587 = vld [vmem:[%s437 + $0xf8] sm:$0xff]
        %v588 = vld [vmem:[%s437 + $0x108] sm:$0xff]
        %v589 = vld [vmem:[%s437 + $0x110] sm:$0xff]
        %v590 = vld [vmem:[%s437 + $0x120] sm:$0xff]
        %v591 = vld [vmem:[%s437 + $0x128] sm:$0xff]
        %v592 = vld [vmem:[%s437 + $0x138] sm:$0xff]
        %v593 = vld [vmem:[%s437 + $0x140] sm:$0xff]
        %v594 = vld [vmem:[%s437 + $0x150] sm:$0xff]
        %v595 = vld [vmem:[%s437 + $0x158] sm:$0xff]
        %v596 = vld [vmem:[%s437 + $0x168] sm:$0xff]
        %v597 = vld [vmem:[%s437 + $0x170] sm:$0xff]
        %v598 = vld [vmem:[%s437 + $0x1] sm:$0xff]
        %v599 = vld [vmem:[%s437 + $0x9] sm:$0xff]
        %v600 = vld [vmem:[%s437 + $0x19] sm:$0xff]
        %v601 = vld [vmem:[%s437 + $0x21] sm:$0xff]
        %v602 = vld [vmem:[%s437 + $0x31] sm:$0xff]
        %v603 = vld [vmem:[%s437 + $0x39] sm:$0xff]
        %v604 = vld [vmem:[%s437 + $0x49] sm:$0xff]
        %v605 = vld [vmem:[%s437 + $0x51] sm:$0xff]
        %v606 = vld [vmem:[%s437 + $0x61] sm:$0xff]
        %v607 = vld [vmem:[%s437 + $0x69] sm:$0xff]
        %v608 = vld [vmem:[%s437 + $0x79] sm:$0xff]
        %v609 = vld [vmem:[%s437 + $0x81] sm:$0xff]
        %v610 = vld [vmem:[%s437 + $0x91] sm:$0xff]
        %v611 = vld [vmem:[%s437 + $0x99] sm:$0xff]
        %v612 = vld [vmem:[%s437 + $0xa9] sm:$0xff]
        %v613 = vld [vmem:[%s437 + $0xb1] sm:$0xff]
        %v614 = vld [vmem:[%s437 + $0xc1] sm:$0xff]
        %v615 = vld [vmem:[%s437 + $0xc9] sm:$0xff]
        %v616 = vld [vmem:[%s437 + $0xd9] sm:$0xff]
        %v617 = vld [vmem:[%s437 + $0xe1] sm:$0xff]
        %v618 = vld [vmem:[%s437 + $0xf1] sm:$0xff]
        %v619 = vld [vmem:[%s437 + $0xf9] sm:$0xff]
        %v620 = vld [vmem:[%s437 + $0x109] sm:$0xff]
        %v621 = vld [vmem:[%s437 + $0x111] sm:$0xff]
        %v622 = vld [vmem:[%s437 + $0x121] sm:$0xff]
        %v623 = vld [vmem:[%s437 + $0x129] sm:$0xff]
        %v624 = vld [vmem:[%s437 + $0x139] sm:$0xff]
        %v625 = vld [vmem:[%s437 + $0x141] sm:$0xff]
        %v626 = vld [vmem:[%s437 + $0x151] sm:$0xff]
        %v627 = vld [vmem:[%s437 + $0x159] sm:$0xff]
        %v628 = vld [vmem:[%s437 + $0x169] sm:$0xff]
        %v629 = vld [vmem:[%s437 + $0x171] sm:$0xff]
        %v630 = vld [vmem:[%s437 + $0x2] sm:$0xff]
        %v631 = vld [vmem:[%s437 + $0xa] sm:$0xff]
        %v632 = vld [vmem:[%s437 + $0x1a] sm:$0xff]
        %v633 = vld [vmem:[%s437 + $0x22] sm:$0xff]
        %v634 = vld [vmem:[%s437 + $0x32] sm:$0xff]
        %v635 = vld [vmem:[%s437 + $0x3a] sm:$0xff]
        %v636 = vld [vmem:[%s437 + $0x4a] sm:$0xff]
        %v637 = vld [vmem:[%s437 + $0x52] sm:$0xff]
        %v638 = vld [vmem:[%s437 + $0x62] sm:$0xff]
        %v639 = vld [vmem:[%s437 + $0x6a] sm:$0xff]
        %v640 = vld [vmem:[%s437 + $0x7a] sm:$0xff]
        %v641 = vld [vmem:[%s437 + $0x82] sm:$0xff]
        %v642 = vld [vmem:[%s437 + $0x92] sm:$0xff]
        %v643 = vld [vmem:[%s437 + $0x9a] sm:$0xff]
        %v644 = vld [vmem:[%s437 + $0xaa] sm:$0xff]
        %v645 = vld [vmem:[%s437 + $0xb2] sm:$0xff]
        %v646 = vld [vmem:[%s437 + $0xc2] sm:$0xff]
        %v647 = vld [vmem:[%s437 + $0xca] sm:$0xff]
        %v648 = vld [vmem:[%s437 + $0xda] sm:$0xff]
        %v649 = vld [vmem:[%s437 + $0xe2] sm:$0xff]
        %v650 = vld [vmem:[%s437 + $0xf2] sm:$0xff]
        %v651 = vld [vmem:[%s437 + $0xfa] sm:$0xff]
        %v652 = vld [vmem:[%s437 + $0x10a] sm:$0xff]
        %v653 = vld [vmem:[%s437 + $0x112] sm:$0xff]
        %v654 = vld [vmem:[%s437 + $0x122] sm:$0xff]
        %v655 = vld [vmem:[%s437 + $0x12a] sm:$0xff]
        %v656 = vld [vmem:[%s437 + $0x13a] sm:$0xff]
        %v657 = vld [vmem:[%s437 + $0x142] sm:$0xff]
        %v658 = vld [vmem:[%s437 + $0x152] sm:$0xff]
        %v659 = vld [vmem:[%s437 + $0x15a] sm:$0xff]
        %v660 = vld [vmem:[%s437 + $0x16a] sm:$0xff]
        %v661 = vld [vmem:[%s437 + $0x172] sm:$0xff]
        %s662 = scalar_lea.vmem [#allocation2], 48
        %v663 = vld [vmem:[%s662] sm:$0xff]
        %v664 = vld [vmem:[%s662 + $0x8] sm:$0xff]
        %v665 = vld [vmem:[%s662 + $0x18] sm:$0xff]
        %v666 = vld [vmem:[%s662 + $0x20] sm:$0xff]
        %v667 = vld [vmem:[%s662 + $0x30] sm:$0xff]
        %v668 = vld [vmem:[%s662 + $0x38] sm:$0xff]
        %v669 = vld [vmem:[%s662 + $0x48] sm:$0xff]
        %v670 = vld [vmem:[%s662 + $0x50] sm:$0xff]
        %v671 = vld [vmem:[%s662 + $0x60] sm:$0xff]
        %v672 = vld [vmem:[%s662 + $0x68] sm:$0xff]
        %v673 = vld [vmem:[%s662 + $0x78] sm:$0xff]
        %v674 = vld [vmem:[%s662 + $0x80] sm:$0xff]
        %v675 = vld [vmem:[%s662 + $0x90] sm:$0xff]
        %v676 = vld [vmem:[%s662 + $0x98] sm:$0xff]
        %v677 = vld [vmem:[%s662 + $0xa8] sm:$0xff]
        %v678 = vld [vmem:[%s662 + $0xb0] sm:$0xff]
        %v679 = vld [vmem:[%s662 + $0xc0] sm:$0xff]
        %v680 = vld [vmem:[%s662 + $0xc8] sm:$0xff]
        %v681 = vld [vmem:[%s662 + $0xd8] sm:$0xff]
        %v682 = vld [vmem:[%s662 + $0xe0] sm:$0xff]
        %v683 = vld [vmem:[%s662 + $0xf0] sm:$0xff]
        %v684 = vld [vmem:[%s662 + $0xf8] sm:$0xff]
        %v685 = vld [vmem:[%s662 + $0x108] sm:$0xff]
        %v686 = vld [vmem:[%s662 + $0x110] sm:$0xff]
        %v687 = vld [vmem:[%s662 + $0x120] sm:$0xff]
        %v688 = vld [vmem:[%s662 + $0x128] sm:$0xff]
        %v689 = vld [vmem:[%s662 + $0x138] sm:$0xff]
        %v690 = vld [vmem:[%s662 + $0x140] sm:$0xff]
        %v691 = vld [vmem:[%s662 + $0x150] sm:$0xff]
        %v692 = vld [vmem:[%s662 + $0x158] sm:$0xff]
        %v693 = vld [vmem:[%s662 + $0x168] sm:$0xff]
        %v694 = vld [vmem:[%s662 + $0x170] sm:$0xff]
        %v695 = vld [vmem:[%s662 + $0x1] sm:$0xff]
        %v696 = vld [vmem:[%s662 + $0x9] sm:$0xff]
        %v697 = vld [vmem:[%s662 + $0x19] sm:$0xff]
        %v698 = vld [vmem:[%s662 + $0x21] sm:$0xff]
        %v699 = vld [vmem:[%s662 + $0x31] sm:$0xff]
        %v700 = vld [vmem:[%s662 + $0x39] sm:$0xff]
        %v701 = vld [vmem:[%s662 + $0x49] sm:$0xff]
        %v702 = vld [vmem:[%s662 + $0x51] sm:$0xff]
        %v703 = vld [vmem:[%s662 + $0x61] sm:$0xff]
        %v704 = vld [vmem:[%s662 + $0x69] sm:$0xff]
        %v705 = vld [vmem:[%s662 + $0x79] sm:$0xff]
        %v706 = vld [vmem:[%s662 + $0x81] sm:$0xff]
        %v707 = vld [vmem:[%s662 + $0x91] sm:$0xff]
        %v708 = vld [vmem:[%s662 + $0x99] sm:$0xff]
        %v709 = vld [vmem:[%s662 + $0xa9] sm:$0xff]
        %v710 = vld [vmem:[%s662 + $0xb1] sm:$0xff]
        %v711 = vld [vmem:[%s662 + $0xc1] sm:$0xff]
        %v712 = vld [vmem:[%s662 + $0xc9] sm:$0xff]
        %v713 = vld [vmem:[%s662 + $0xd9] sm:$0xff]
        %v714 = vld [vmem:[%s662 + $0xe1] sm:$0xff]
        %v715 = vld [vmem:[%s662 + $0xf1] sm:$0xff]
        %v716 = vld [vmem:[%s662 + $0xf9] sm:$0xff]
        %v717 = vld [vmem:[%s662 + $0x109] sm:$0xff]
        %v718 = vld [vmem:[%s662 + $0x111] sm:$0xff]
        %v719 = vld [vmem:[%s662 + $0x121] sm:$0xff]
        %v720 = vld [vmem:[%s662 + $0x129] sm:$0xff]
        %v721 = vld [vmem:[%s662 + $0x139] sm:$0xff]
        %v722 = vld [vmem:[%s662 + $0x141] sm:$0xff]
        %v723 = vld [vmem:[%s662 + $0x151] sm:$0xff]
        %v724 = vld [vmem:[%s662 + $0x159] sm:$0xff]
        %v725 = vld [vmem:[%s662 + $0x169] sm:$0xff]
        %v726 = vld [vmem:[%s662 + $0x171] sm:$0xff]
        %v727 = vld [vmem:[%s662 + $0x2] sm:$0xff]
        %v728 = vld [vmem:[%s662 + $0xa] sm:$0xff]
        %v729 = vld [vmem:[%s662 + $0x1a] sm:$0xff]
        %v730 = vld [vmem:[%s662 + $0x22] sm:$0xff]
        %v731 = vld [vmem:[%s662 + $0x32] sm:$0xff]
        %v732 = vld [vmem:[%s662 + $0x3a] sm:$0xff]
        %v733 = vld [vmem:[%s662 + $0x4a] sm:$0xff]
        %v734 = vld [vmem:[%s662 + $0x52] sm:$0xff]
        %v735 = vld [vmem:[%s662 + $0x62] sm:$0xff]
        %v736 = vld [vmem:[%s662 + $0x6a] sm:$0xff]
        %v737 = vld [vmem:[%s662 + $0x7a] sm:$0xff]
        %v738 = vld [vmem:[%s662 + $0x82] sm:$0xff]
        %v739 = vld [vmem:[%s662 + $0x92] sm:$0xff]
        %v740 = vld [vmem:[%s662 + $0x9a] sm:$0xff]
        %v741 = vld [vmem:[%s662 + $0xaa] sm:$0xff]
        %v742 = vld [vmem:[%s662 + $0xb2] sm:$0xff]
        %v743 = vld [vmem:[%s662 + $0xc2] sm:$0xff]
        %v744 = vld [vmem:[%s662 + $0xca] sm:$0xff]
        %v745 = vld [vmem:[%s662 + $0xda] sm:$0xff]
        %v746 = vld [vmem:[%s662 + $0xe2] sm:$0xff]
        %v747 = vld [vmem:[%s662 + $0xf2] sm:$0xff]
        %v748 = vld [vmem:[%s662 + $0xfa] sm:$0xff]
        %v749 = vld [vmem:[%s662 + $0x10a] sm:$0xff]
        %v750 = vld [vmem:[%s662 + $0x112] sm:$0xff]
        %v751 = vld [vmem:[%s662 + $0x122] sm:$0xff]
        %v752 = vld [vmem:[%s662 + $0x12a] sm:$0xff]
        %v753 = vld [vmem:[%s662 + $0x13a] sm:$0xff]
        %v754 = vld [vmem:[%s662 + $0x142] sm:$0xff]
        %v755 = vld [vmem:[%s662 + $0x152] sm:$0xff]
        %v756 = vld [vmem:[%s662 + $0x15a] sm:$0xff]
        %v757 = vld [vmem:[%s662 + $0x16a] sm:$0xff]
        %v758 = vld [vmem:[%s662 + $0x172] sm:$0xff]
        %791 = vrot.lane.b32.xlu0 %v502, 4
        %v792 = vpop.permute.xlu0 %791
        %793 = vrot.lane.b32.xlu0 %v503, 4
        %v794 = vpop.permute.xlu0 %793
        %795 = vrot.lane.b32.xlu0 %v504, 4
        %v796 = vpop.permute.xlu0 %795
        %797 = vrot.lane.b32.xlu0 %v505, 4
        %v798 = vpop.permute.xlu0 %797
        %799 = vrot.lane.b32.xlu0 %v506, 4
        %v800 = vpop.permute.xlu0 %799
        %801 = vrot.lane.b32.xlu0 %v507, 4
        %v802 = vpop.permute.xlu0 %801
        %803 = vrot.lane.b32.xlu0 %v508, 4
        %v804 = vpop.permute.xlu0 %803
        %805 = vrot.lane.b32.xlu0 %v509, 4
        %v806 = vpop.permute.xlu0 %805
        %807 = vrot.lane.b32.xlu0 %v510, 4
        %v808 = vpop.permute.xlu0 %807
        %809 = vrot.lane.b32.xlu0 %v511, 4
        %v810 = vpop.permute.xlu0 %809
        %811 = vrot.lane.b32.xlu0 %v512, 4
        %v812 = vpop.permute.xlu0 %811
        %813 = vrot.lane.b32.xlu0 %v513, 4
        %v814 = vpop.permute.xlu0 %813
        %815 = vrot.lane.b32.xlu0 %v514, 4
        %v816 = vpop.permute.xlu0 %815
        %817 = vrot.lane.b32.xlu0 %v515, 4
        %v818 = vpop.permute.xlu0 %817
        %819 = vrot.lane.b32.xlu0 %v516, 4
        %v820 = vpop.permute.xlu0 %819
        %821 = vrot.lane.b32.xlu0 %v517, 4
        %v822 = vpop.permute.xlu0 %821
        %823 = vrot.lane.b32.xlu0 %v518, 4
        %v824 = vpop.permute.xlu0 %823
        %825 = vrot.lane.b32.xlu0 %v519, 4
        %v826 = vpop.permute.xlu0 %825
        %827 = vrot.lane.b32.xlu0 %v520, 4
        %v828 = vpop.permute.xlu0 %827
        %829 = vrot.lane.b32.xlu0 %v521, 4
        %v830 = vpop.permute.xlu0 %829
        %831 = vrot.lane.b32.xlu0 %v522, 4
        %v832 = vpop.permute.xlu0 %831
        %833 = vrot.lane.b32.xlu0 %v523, 4
        %v834 = vpop.permute.xlu0 %833
        %835 = vrot.lane.b32.xlu0 %v524, 4
        %v836 = vpop.permute.xlu0 %835
        %837 = vrot.lane.b32.xlu0 %v525, 4
        %v838 = vpop.permute.xlu0 %837
        %839 = vrot.lane.b32.xlu0 %v526, 4
        %v840 = vpop.permute.xlu0 %839
        %841 = vrot.lane.b32.xlu0 %v527, 4
        %v842 = vpop.permute.xlu0 %841
        %843 = vrot.lane.b32.xlu0 %v528, 4
        %v844 = vpop.permute.xlu0 %843
        %845 = vrot.lane.b32.xlu0 %v529, 4
        %v846 = vpop.permute.xlu0 %845
        %847 = vrot.lane.b32.xlu0 %v530, 4
        %v848 = vpop.permute.xlu0 %847
        %849 = vrot.lane.b32.xlu0 %v531, 4
        %v850 = vpop.permute.xlu0 %849
        %851 = vrot.lane.b32.xlu0 %v532, 4
        %v852 = vpop.permute.xlu0 %851
        %853 = vrot.lane.b32.xlu0 %v533, 4
        %v854 = vpop.permute.xlu0 %853
        %919 = vrot.lane.b32.xlu0 %v534, 8
        %v920 = vpop.permute.xlu0 %919
        %921 = vrot.lane.b32.xlu0 %v535, 8
        %v922 = vpop.permute.xlu0 %921
        %923 = vrot.lane.b32.xlu0 %v536, 8
        %v924 = vpop.permute.xlu0 %923
        %925 = vrot.lane.b32.xlu0 %v537, 8
        %v926 = vpop.permute.xlu0 %925
        %927 = vrot.lane.b32.xlu0 %v538, 8
        %v928 = vpop.permute.xlu0 %927
        %929 = vrot.lane.b32.xlu0 %v539, 8
        %v930 = vpop.permute.xlu0 %929
        %931 = vrot.lane.b32.xlu0 %v540, 8
        %v932 = vpop.permute.xlu0 %931
        %933 = vrot.lane.b32.xlu0 %v541, 8
        %v934 = vpop.permute.xlu0 %933
        %935 = vrot.lane.b32.xlu0 %v542, 8
        %v936 = vpop.permute.xlu0 %935
        %937 = vrot.lane.b32.xlu0 %v543, 8
        %v938 = vpop.permute.xlu0 %937
        %939 = vrot.lane.b32.xlu0 %v544, 8
        %v940 = vpop.permute.xlu0 %939
        %941 = vrot.lane.b32.xlu0 %v545, 8
        %v942 = vpop.permute.xlu0 %941
        %943 = vrot.lane.b32.xlu0 %v546, 8
        %v944 = vpop.permute.xlu0 %943
        %945 = vrot.lane.b32.xlu0 %v547, 8
        %v946 = vpop.permute.xlu0 %945
        %947 = vrot.lane.b32.xlu0 %v548, 8
        %v948 = vpop.permute.xlu0 %947
        %949 = vrot.lane.b32.xlu0 %v549, 8
        %v950 = vpop.permute.xlu0 %949
        %951 = vrot.lane.b32.xlu0 %v550, 8
        %v952 = vpop.permute.xlu0 %951
        %953 = vrot.lane.b32.xlu0 %v551, 8
        %v954 = vpop.permute.xlu0 %953
        %955 = vrot.lane.b32.xlu0 %v552, 8
        %v956 = vpop.permute.xlu0 %955
        %957 = vrot.lane.b32.xlu0 %v553, 8
        %v958 = vpop.permute.xlu0 %957
        %959 = vrot.lane.b32.xlu0 %v554, 8
        %v960 = vpop.permute.xlu0 %959
        %961 = vrot.lane.b32.xlu0 %v555, 8
        %v962 = vpop.permute.xlu0 %961
        %963 = vrot.lane.b32.xlu0 %v556, 8
        %v964 = vpop.permute.xlu0 %963
        %965 = vrot.lane.b32.xlu0 %v557, 8
        %v966 = vpop.permute.xlu0 %965
        %967 = vrot.lane.b32.xlu0 %v558, 8
        %v968 = vpop.permute.xlu0 %967
        %969 = vrot.lane.b32.xlu0 %v559, 8
        %v970 = vpop.permute.xlu0 %969
        %971 = vrot.lane.b32.xlu0 %v560, 8
        %v972 = vpop.permute.xlu0 %971
        %973 = vrot.lane.b32.xlu0 %v561, 8
        %v974 = vpop.permute.xlu0 %973
        %975 = vrot.lane.b32.xlu0 %v562, 8
        %v976 = vpop.permute.xlu0 %975
        %977 = vrot.lane.b32.xlu0 %v563, 8
        %v978 = vpop.permute.xlu0 %977
        %979 = vrot.lane.b32.xlu0 %v564, 8
        %v980 = vpop.permute.xlu0 %979
        %981 = vrot.lane.b32.xlu0 %v565, 8
        %v982 = vpop.permute.xlu0 %981
        %1047 = vrot.lane.b32.xlu0 %v566, 12
        %v1048 = vpop.permute.xlu0 %1047
        %1049 = vrot.lane.b32.xlu0 %v567, 12
        %v1050 = vpop.permute.xlu0 %1049
        %1051 = vrot.lane.b32.xlu0 %v568, 12
        %v1052 = vpop.permute.xlu0 %1051
        %1053 = vrot.lane.b32.xlu0 %v569, 12
        %v1054 = vpop.permute.xlu0 %1053
        %1055 = vrot.lane.b32.xlu0 %v570, 12
        %v1056 = vpop.permute.xlu0 %1055
        %1057 = vrot.lane.b32.xlu0 %v571, 12
        %v1058 = vpop.permute.xlu0 %1057
        %1059 = vrot.lane.b32.xlu0 %v572, 12
        %v1060 = vpop.permute.xlu0 %1059
        %1061 = vrot.lane.b32.xlu0 %v573, 12
        %v1062 = vpop.permute.xlu0 %1061
        %1063 = vrot.lane.b32.xlu0 %v574, 12
        %v1064 = vpop.permute.xlu0 %1063
        %1065 = vrot.lane.b32.xlu0 %v575, 12
        %v1066 = vpop.permute.xlu0 %1065
        %1067 = vrot.lane.b32.xlu0 %v576, 12
        %v1068 = vpop.permute.xlu0 %1067
        %1069 = vrot.lane.b32.xlu0 %v577, 12
        %v1070 = vpop.permute.xlu0 %1069
        %1071 = vrot.lane.b32.xlu0 %v578, 12
        %v1072 = vpop.permute.xlu0 %1071
        %1073 = vrot.lane.b32.xlu0 %v579, 12
        %v1074 = vpop.permute.xlu0 %1073
        %1075 = vrot.lane.b32.xlu0 %v580, 12
        %v1076 = vpop.permute.xlu0 %1075
        %1077 = vrot.lane.b32.xlu0 %v581, 12
        %v1078 = vpop.permute.xlu0 %1077
        %1079 = vrot.lane.b32.xlu0 %v582, 12
        %v1080 = vpop.permute.xlu0 %1079
        %1081 = vrot.lane.b32.xlu0 %v583, 12
        %v1082 = vpop.permute.xlu0 %1081
        %1083 = vrot.lane.b32.xlu0 %v584, 12
        %v1084 = vpop.permute.xlu0 %1083
        %1085 = vrot.lane.b32.xlu0 %v585, 12
        %v1086 = vpop.permute.xlu0 %1085
        %1087 = vrot.lane.b32.xlu0 %v586, 12
        %v1088 = vpop.permute.xlu0 %1087
        %1089 = vrot.lane.b32.xlu0 %v587, 12
        %v1090 = vpop.permute.xlu0 %1089
        %1091 = vrot.lane.b32.xlu0 %v588, 12
        %v1092 = vpop.permute.xlu0 %1091
        %1093 = vrot.lane.b32.xlu0 %v589, 12
        %v1094 = vpop.permute.xlu0 %1093
        %1095 = vrot.lane.b32.xlu0 %v590, 12
        %v1096 = vpop.permute.xlu0 %1095
        %1097 = vrot.lane.b32.xlu0 %v591, 12
        %v1098 = vpop.permute.xlu0 %1097
        %1099 = vrot.lane.b32.xlu0 %v592, 12
        %v1100 = vpop.permute.xlu0 %1099
        %1101 = vrot.lane.b32.xlu0 %v593, 12
        %v1102 = vpop.permute.xlu0 %1101
        %1103 = vrot.lane.b32.xlu0 %v594, 12
        %v1104 = vpop.permute.xlu0 %1103
        %1105 = vrot.lane.b32.xlu0 %v595, 12
        %v1106 = vpop.permute.xlu0 %1105
        %1107 = vrot.lane.b32.xlu0 %v596, 12
        %v1108 = vpop.permute.xlu0 %1107
        %1109 = vrot.lane.b32.xlu0 %v597, 12
        %v1110 = vpop.permute.xlu0 %1109
        %1175 = vrot.lane.b32.xlu0 %v598, 16
        %v1176 = vpop.permute.xlu0 %1175
        %1177 = vrot.lane.b32.xlu0 %v599, 16
        %v1178 = vpop.permute.xlu0 %1177
        %1179 = vrot.lane.b32.xlu0 %v600, 16
        %v1180 = vpop.permute.xlu0 %1179
        %1181 = vrot.lane.b32.xlu0 %v601, 16
        %v1182 = vpop.permute.xlu0 %1181
        %1183 = vrot.lane.b32.xlu0 %v602, 16
        %v1184 = vpop.permute.xlu0 %1183
        %1185 = vrot.lane.b32.xlu0 %v603, 16
        %v1186 = vpop.permute.xlu0 %1185
        %1187 = vrot.lane.b32.xlu0 %v604, 16
        %v1188 = vpop.permute.xlu0 %1187
        %1189 = vrot.lane.b32.xlu0 %v605, 16
        %v1190 = vpop.permute.xlu0 %1189
        %1191 = vrot.lane.b32.xlu0 %v606, 16
        %v1192 = vpop.permute.xlu0 %1191
        %1193 = vrot.lane.b32.xlu0 %v607, 16
        %v1194 = vpop.permute.xlu0 %1193
        %1195 = vrot.lane.b32.xlu0 %v608, 16
        %v1196 = vpop.permute.xlu0 %1195
        %1197 = vrot.lane.b32.xlu0 %v609, 16
        %v1198 = vpop.permute.xlu0 %1197
        %1199 = vrot.lane.b32.xlu0 %v610, 16
        %v1200 = vpop.permute.xlu0 %1199
        %1201 = vrot.lane.b32.xlu0 %v611, 16
        %v1202 = vpop.permute.xlu0 %1201
        %1203 = vrot.lane.b32.xlu0 %v612, 16
        %v1204 = vpop.permute.xlu0 %1203
        %1205 = vrot.lane.b32.xlu0 %v613, 16
        %v1206 = vpop.permute.xlu0 %1205
        %1207 = vrot.lane.b32.xlu0 %v614, 16
        %v1208 = vpop.permute.xlu0 %1207
        %1209 = vrot.lane.b32.xlu0 %v615, 16
        %v1210 = vpop.permute.xlu0 %1209
        %1211 = vrot.lane.b32.xlu0 %v616, 16
        %v1212 = vpop.permute.xlu0 %1211
        %1213 = vrot.lane.b32.xlu0 %v617, 16
        %v1214 = vpop.permute.xlu0 %1213
        %1215 = vrot.lane.b32.xlu0 %v618, 16
        %v1216 = vpop.permute.xlu0 %1215
        %1217 = vrot.lane.b32.xlu0 %v619, 16
        %v1218 = vpop.permute.xlu0 %1217
        %1219 = vrot.lane.b32.xlu0 %v620, 16
        %v1220 = vpop.permute.xlu0 %1219
        %1221 = vrot.lane.b32.xlu0 %v621, 16
        %v1222 = vpop.permute.xlu0 %1221
        %1223 = vrot.lane.b32.xlu0 %v622, 16
        %v1224 = vpop.permute.xlu0 %1223
        %1225 = vrot.lane.b32.xlu0 %v623, 16
        %v1226 = vpop.permute.xlu0 %1225
        %1227 = vrot.lane.b32.xlu0 %v624, 16
        %v1228 = vpop.permute.xlu0 %1227
        %1229 = vrot.lane.b32.xlu0 %v625, 16
        %v1230 = vpop.permute.xlu0 %1229
        %1231 = vrot.lane.b32.xlu0 %v626, 16
        %v1232 = vpop.permute.xlu0 %1231
        %1233 = vrot.lane.b32.xlu0 %v627, 16
        %v1234 = vpop.permute.xlu0 %1233
        %1235 = vrot.lane.b32.xlu0 %v628, 16
        %v1236 = vpop.permute.xlu0 %1235
        %1237 = vrot.lane.b32.xlu0 %v629, 16
        %v1238 = vpop.permute.xlu0 %1237
        %1303 = vrot.lane.b32.xlu0 %v630, 20
        %v1304 = vpop.permute.xlu0 %1303
        %1305 = vrot.lane.b32.xlu0 %v631, 20
        %v1306 = vpop.permute.xlu0 %1305
        %1307 = vrot.lane.b32.xlu0 %v632, 20
        %v1308 = vpop.permute.xlu0 %1307
        %1309 = vrot.lane.b32.xlu0 %v633, 20
        %v1310 = vpop.permute.xlu0 %1309
        %1311 = vrot.lane.b32.xlu0 %v634, 20
        %v1312 = vpop.permute.xlu0 %1311
        %1313 = vrot.lane.b32.xlu0 %v635, 20
        %v1314 = vpop.permute.xlu0 %1313
        %1315 = vrot.lane.b32.xlu0 %v636, 20
        %v1316 = vpop.permute.xlu0 %1315
        %1317 = vrot.lane.b32.xlu0 %v637, 20
        %v1318 = vpop.permute.xlu0 %1317
        %1319 = vrot.lane.b32.xlu0 %v638, 20
        %v1320 = vpop.permute.xlu0 %1319
        %1321 = vrot.lane.b32.xlu0 %v639, 20
        %v1322 = vpop.permute.xlu0 %1321
        %1323 = vrot.lane.b32.xlu0 %v640, 20
        %v1324 = vpop.permute.xlu0 %1323
        %1325 = vrot.lane.b32.xlu0 %v641, 20
        %v1326 = vpop.permute.xlu0 %1325
        %1327 = vrot.lane.b32.xlu0 %v642, 20
        %v1328 = vpop.permute.xlu0 %1327
        %1329 = vrot.lane.b32.xlu0 %v643, 20
        %v1330 = vpop.permute.xlu0 %1329
        %1331 = vrot.lane.b32.xlu0 %v644, 20
        %v1332 = vpop.permute.xlu0 %1331
        %1333 = vrot.lane.b32.xlu0 %v645, 20
        %v1334 = vpop.permute.xlu0 %1333
        %1335 = vrot.lane.b32.xlu0 %v646, 20
        %v1336 = vpop.permute.xlu0 %1335
        %1337 = vrot.lane.b32.xlu0 %v647, 20
        %v1338 = vpop.permute.xlu0 %1337
        %1339 = vrot.lane.b32.xlu0 %v648, 20
        %v1340 = vpop.permute.xlu0 %1339
        %1341 = vrot.lane.b32.xlu0 %v649, 20
        %v1342 = vpop.permute.xlu0 %1341
        %1343 = vrot.lane.b32.xlu0 %v650, 20
        %v1344 = vpop.permute.xlu0 %1343
        %1345 = vrot.lane.b32.xlu0 %v651, 20
        %v1346 = vpop.permute.xlu0 %1345
        %1347 = vrot.lane.b32.xlu0 %v652, 20
        %v1348 = vpop.permute.xlu0 %1347
        %1349 = vrot.lane.b32.xlu0 %v653, 20
        %v1350 = vpop.permute.xlu0 %1349
        %1351 = vrot.lane.b32.xlu0 %v654, 20
        %v1352 = vpop.permute.xlu0 %1351
        %1353 = vrot.lane.b32.xlu0 %v655, 20
        %v1354 = vpop.permute.xlu0 %1353
        %1355 = vrot.lane.b32.xlu0 %v656, 20
        %v1356 = vpop.permute.xlu0 %1355
        %1357 = vrot.lane.b32.xlu0 %v657, 20
        %v1358 = vpop.permute.xlu0 %1357
        %1359 = vrot.lane.b32.xlu0 %v658, 20
        %v1360 = vpop.permute.xlu0 %1359
        %1361 = vrot.lane.b32.xlu0 %v659, 20
        %v1362 = vpop.permute.xlu0 %1361
        %1363 = vrot.lane.b32.xlu0 %v660, 20
        %v1364 = vpop.permute.xlu0 %1363
        %1365 = vrot.lane.b32.xlu0 %v661, 20
        %v1366 = vpop.permute.xlu0 %1365
        %1431 = vrot.lane.b32.xlu0 %v663, 24
        %v1432 = vpop.permute.xlu0 %1431
        %1433 = vrot.lane.b32.xlu0 %v664, 24
        %v1434 = vpop.permute.xlu0 %1433
        %1435 = vrot.lane.b32.xlu0 %v665, 24
        %v1436 = vpop.permute.xlu0 %1435
        %1437 = vrot.lane.b32.xlu0 %v666, 24
        %v1438 = vpop.permute.xlu0 %1437
        %1439 = vrot.lane.b32.xlu0 %v667, 24
        %v1440 = vpop.permute.xlu0 %1439
        %1441 = vrot.lane.b32.xlu0 %v668, 24
        %v1442 = vpop.permute.xlu0 %1441
        %1443 = vrot.lane.b32.xlu0 %v669, 24
        %v1444 = vpop.permute.xlu0 %1443
        %1445 = vrot.lane.b32.xlu0 %v670, 24
        %v1446 = vpop.permute.xlu0 %1445
        %1447 = vrot.lane.b32.xlu0 %v671, 24
        %v1448 = vpop.permute.xlu0 %1447
        %1449 = vrot.lane.b32.xlu0 %v672, 24
        %v1450 = vpop.permute.xlu0 %1449
        %1451 = vrot.lane.b32.xlu0 %v673, 24
        %v1452 = vpop.permute.xlu0 %1451
        %1453 = vrot.lane.b32.xlu0 %v674, 24
        %v1454 = vpop.permute.xlu0 %1453
        %1455 = vrot.lane.b32.xlu0 %v675, 24
        %v1456 = vpop.permute.xlu0 %1455
        %1457 = vrot.lane.b32.xlu0 %v676, 24
        %v1458 = vpop.permute.xlu0 %1457
        %1459 = vrot.lane.b32.xlu0 %v677, 24
        %v1460 = vpop.permute.xlu0 %1459
        %1461 = vrot.lane.b32.xlu0 %v678, 24
        %v1462 = vpop.permute.xlu0 %1461
        %1463 = vrot.lane.b32.xlu0 %v679, 24
        %v1464 = vpop.permute.xlu0 %1463
        %1465 = vrot.lane.b32.xlu0 %v680, 24
        %v1466 = vpop.permute.xlu0 %1465
        %1467 = vrot.lane.b32.xlu0 %v681, 24
        %v1468 = vpop.permute.xlu0 %1467
        %1469 = vrot.lane.b32.xlu0 %v682, 24
        %v1470 = vpop.permute.xlu0 %1469
        %1471 = vrot.lane.b32.xlu0 %v683, 24
        %v1472 = vpop.permute.xlu0 %1471
        %1473 = vrot.lane.b32.xlu0 %v684, 24
        %v1474 = vpop.permute.xlu0 %1473
        %1475 = vrot.lane.b32.xlu0 %v685, 24
        %v1476 = vpop.permute.xlu0 %1475
        %1477 = vrot.lane.b32.xlu0 %v686, 24
        %v1478 = vpop.permute.xlu0 %1477
        %1479 = vrot.lane.b32.xlu0 %v687, 24
        %v1480 = vpop.permute.xlu0 %1479
        %1481 = vrot.lane.b32.xlu0 %v688, 24
        %v1482 = vpop.permute.xlu0 %1481
        %1483 = vrot.lane.b32.xlu0 %v689, 24
        %v1484 = vpop.permute.xlu0 %1483
        %1485 = vrot.lane.b32.xlu0 %v690, 24
        %v1486 = vpop.permute.xlu0 %1485
        %1487 = vrot.lane.b32.xlu0 %v691, 24
        %v1488 = vpop.permute.xlu0 %1487
        %1489 = vrot.lane.b32.xlu0 %v692, 24
        %v1490 = vpop.permute.xlu0 %1489
        %1491 = vrot.lane.b32.xlu0 %v693, 24
        %v1492 = vpop.permute.xlu0 %1491
        %1493 = vrot.lane.b32.xlu0 %v694, 24
        %v1494 = vpop.permute.xlu0 %1493
        %1559 = vrot.lane.b32.xlu0 %v695, 28
        %v1560 = vpop.permute.xlu0 %1559
        %1561 = vrot.lane.b32.xlu0 %v696, 28
        %v1562 = vpop.permute.xlu0 %1561
        %1563 = vrot.lane.b32.xlu0 %v697, 28
        %v1564 = vpop.permute.xlu0 %1563
        %1565 = vrot.lane.b32.xlu0 %v698, 28
        %v1566 = vpop.permute.xlu0 %1565
        %1567 = vrot.lane.b32.xlu0 %v699, 28
        %v1568 = vpop.permute.xlu0 %1567
        %1569 = vrot.lane.b32.xlu0 %v700, 28
        %v1570 = vpop.permute.xlu0 %1569
        %1571 = vrot.lane.b32.xlu0 %v701, 28
        %v1572 = vpop.permute.xlu0 %1571
        %1573 = vrot.lane.b32.xlu0 %v702, 28
        %v1574 = vpop.permute.xlu0 %1573
        %1575 = vrot.lane.b32.xlu0 %v703, 28
        %v1576 = vpop.permute.xlu0 %1575
        %1577 = vrot.lane.b32.xlu0 %v704, 28
        %v1578 = vpop.permute.xlu0 %1577
        %1579 = vrot.lane.b32.xlu0 %v705, 28
        %v1580 = vpop.permute.xlu0 %1579
        %1581 = vrot.lane.b32.xlu0 %v706, 28
        %v1582 = vpop.permute.xlu0 %1581
        %1583 = vrot.lane.b32.xlu0 %v707, 28
        %v1584 = vpop.permute.xlu0 %1583
        %1585 = vrot.lane.b32.xlu0 %v708, 28
        %v1586 = vpop.permute.xlu0 %1585
        %1587 = vrot.lane.b32.xlu0 %v709, 28
        %v1588 = vpop.permute.xlu0 %1587
        %1589 = vrot.lane.b32.xlu0 %v710, 28
        %v1590 = vpop.permute.xlu0 %1589
        %1591 = vrot.lane.b32.xlu0 %v711, 28
        %v1592 = vpop.permute.xlu0 %1591
        %1593 = vrot.lane.b32.xlu0 %v712, 28
        %v1594 = vpop.permute.xlu0 %1593
        %1595 = vrot.lane.b32.xlu0 %v713, 28
        %v1596 = vpop.permute.xlu0 %1595
        %1597 = vrot.lane.b32.xlu0 %v714, 28
        %v1598 = vpop.permute.xlu0 %1597
        %1599 = vrot.lane.b32.xlu0 %v715, 28
        %v1600 = vpop.permute.xlu0 %1599
        %1601 = vrot.lane.b32.xlu0 %v716, 28
        %v1602 = vpop.permute.xlu0 %1601
        %1603 = vrot.lane.b32.xlu0 %v717, 28
        %v1604 = vpop.permute.xlu0 %1603
        %1605 = vrot.lane.b32.xlu0 %v718, 28
        %v1606 = vpop.permute.xlu0 %1605
        %1607 = vrot.lane.b32.xlu0 %v719, 28
        %v1608 = vpop.permute.xlu0 %1607
        %1609 = vrot.lane.b32.xlu0 %v720, 28
        %v1610 = vpop.permute.xlu0 %1609
        %1611 = vrot.lane.b32.xlu0 %v721, 28
        %v1612 = vpop.permute.xlu0 %1611
        %1613 = vrot.lane.b32.xlu0 %v722, 28
        %v1614 = vpop.permute.xlu0 %1613
        %1615 = vrot.lane.b32.xlu0 %v723, 28
        %v1616 = vpop.permute.xlu0 %1615
        %1617 = vrot.lane.b32.xlu0 %v724, 28
        %v1618 = vpop.permute.xlu0 %1617
        %1619 = vrot.lane.b32.xlu0 %v725, 28
        %v1620 = vpop.permute.xlu0 %1619
        %1621 = vrot.lane.b32.xlu0 %v726, 28
        %v1622 = vpop.permute.xlu0 %1621
        %1687 = vrot.lane.b32.xlu0 %v727, 32
        %v1688 = vpop.permute.xlu0 %1687
        %1689 = vrot.lane.b32.xlu0 %v728, 32
        %v1690 = vpop.permute.xlu0 %1689
        %1691 = vrot.lane.b32.xlu0 %v729, 32
        %v1692 = vpop.permute.xlu0 %1691
        %1693 = vrot.lane.b32.xlu0 %v730, 32
        %v1694 = vpop.permute.xlu0 %1693
        %1695 = vrot.lane.b32.xlu0 %v731, 32
        %v1696 = vpop.permute.xlu0 %1695
        %1697 = vrot.lane.b32.xlu0 %v732, 32
        %v1698 = vpop.permute.xlu0 %1697
        %1699 = vrot.lane.b32.xlu0 %v733, 32
        %v1700 = vpop.permute.xlu0 %1699
        %1701 = vrot.lane.b32.xlu0 %v734, 32
        %v1702 = vpop.permute.xlu0 %1701
        %1703 = vrot.lane.b32.xlu0 %v735, 32
        %v1704 = vpop.permute.xlu0 %1703
        %1705 = vrot.lane.b32.xlu0 %v736, 32
        %v1706 = vpop.permute.xlu0 %1705
        %1707 = vrot.lane.b32.xlu0 %v737, 32
        %v1708 = vpop.permute.xlu0 %1707
        %1709 = vrot.lane.b32.xlu0 %v738, 32
        %v1710 = vpop.permute.xlu0 %1709
        %1711 = vrot.lane.b32.xlu0 %v739, 32
        %v1712 = vpop.permute.xlu0 %1711
        %1713 = vrot.lane.b32.xlu0 %v740, 32
        %v1714 = vpop.permute.xlu0 %1713
        %1715 = vrot.lane.b32.xlu0 %v741, 32
        %v1716 = vpop.permute.xlu0 %1715
        %1717 = vrot.lane.b32.xlu0 %v742, 32
        %v1718 = vpop.permute.xlu0 %1717
        %1719 = vrot.lane.b32.xlu0 %v743, 32
        %v1720 = vpop.permute.xlu0 %1719
        %1721 = vrot.lane.b32.xlu0 %v744, 32
        %v1722 = vpop.permute.xlu0 %1721
        %1723 = vrot.lane.b32.xlu0 %v745, 32
        %v1724 = vpop.permute.xlu0 %1723
        %1725 = vrot.lane.b32.xlu0 %v746, 32
        %v1726 = vpop.permute.xlu0 %1725
        %1727 = vrot.lane.b32.xlu0 %v747, 32
        %v1728 = vpop.permute.xlu0 %1727
        %1729 = vrot.lane.b32.xlu0 %v748, 32
        %v1730 = vpop.permute.xlu0 %1729
        %1731 = vrot.lane.b32.xlu0 %v749, 32
        %v1732 = vpop.permute.xlu0 %1731
        %1733 = vrot.lane.b32.xlu0 %v750, 32
        %v1734 = vpop.permute.xlu0 %1733
        %1735 = vrot.lane.b32.xlu0 %v751, 32
        %v1736 = vpop.permute.xlu0 %1735
        %1737 = vrot.lane.b32.xlu0 %v752, 32
        %v1738 = vpop.permute.xlu0 %1737
        %1739 = vrot.lane.b32.xlu0 %v753, 32
        %v1740 = vpop.permute.xlu0 %1739
        %1741 = vrot.lane.b32.xlu0 %v754, 32
        %v1742 = vpop.permute.xlu0 %1741
        %1743 = vrot.lane.b32.xlu0 %v755, 32
        %v1744 = vpop.permute.xlu0 %1743
        %1745 = vrot.lane.b32.xlu0 %v756, 32
        %v1746 = vpop.permute.xlu0 %1745
        %1747 = vrot.lane.b32.xlu0 %v757, 32
        %v1748 = vpop.permute.xlu0 %1747
        %1749 = vrot.lane.b32.xlu0 %v758, 32
        %v1750 = vpop.permute.xlu0 %1749
        %v1783 = vsel %vm381, %v470, %v792
        %v1784 = vsel %vm381, %v471, %v794
        %v1785 = vsel %vm381, %v472, %v796
        %v1786 = vsel %vm381, %v473, %v798
        %v1787 = vsel %vm381, %v474, %v800
        %v1788 = vsel %vm381, %v475, %v802
        %v1789 = vsel %vm381, %v476, %v804
        %v1790 = vsel %vm381, %v477, %v806
        %v1791 = vsel %vm381, %v478, %v808
        %v1792 = vsel %vm381, %v479, %v810
        %v1793 = vsel %vm381, %v480, %v812
        %v1794 = vsel %vm381, %v481, %v814
        %v1795 = vsel %vm381, %v482, %v816
        %v1796 = vsel %vm381, %v483, %v818
        %v1797 = vsel %vm381, %v484, %v820
        %v1798 = vsel %vm381, %v485, %v822
        %v1799 = vsel %vm381, %v486, %v824
        %v1800 = vsel %vm381, %v487, %v826
        %v1801 = vsel %vm381, %v488, %v828
        %v1802 = vsel %vm381, %v489, %v830
        %v1803 = vsel %vm381, %v490, %v832
        %v1804 = vsel %vm381, %v491, %v834
        %v1805 = vsel %vm381, %v492, %v836
        %v1806 = vsel %vm381, %v493, %v838
        %v1807 = vsel %vm381, %v494, %v840
        %v1808 = vsel %vm381, %v495, %v842
        %v1809 = vsel %vm381, %v496, %v844
        %v1810 = vsel %vm381, %v497, %v846
        %v1811 = vsel %vm381, %v498, %v848
        %v1812 = vsel %vm381, %v499, %v850
        %v1813 = vsel %vm381, %v500, %v852
        %v1814 = vsel %vm381, %v501, %v854
        %vm1815 = vcmask 64512
        %v1816 = vsel %vm1815, %v1783, %v920
        %v1817 = vsel %vm1815, %v1784, %v922
        %v1818 = vsel %vm1815, %v1785, %v924
        %v1819 = vsel %vm1815, %v1786, %v926
        %v1820 = vsel %vm1815, %v1787, %v928
        %v1821 = vsel %vm1815, %v1788, %v930
        %v1822 = vsel %vm1815, %v1789, %v932
        %v1823 = vsel %vm1815, %v1790, %v934
        %v1824 = vsel %vm1815, %v1791, %v936
        %v1825 = vsel %vm1815, %v1792, %v938
        %v1826 = vsel %vm1815, %v1793, %v940
        %v1827 = vsel %vm1815, %v1794, %v942
        %v1828 = vsel %vm1815, %v1795, %v944
        %v1829 = vsel %vm1815, %v1796, %v946
        %v1830 = vsel %vm1815, %v1797, %v948
        %v1831 = vsel %vm1815, %v1798, %v950
        %v1832 = vsel %vm1815, %v1799, %v952
        %v1833 = vsel %vm1815, %v1800, %v954
        %v1834 = vsel %vm1815, %v1801, %v956
        %v1835 = vsel %vm1815, %v1802, %v958
        %v1836 = vsel %vm1815, %v1803, %v960
        %v1837 = vsel %vm1815, %v1804, %v962
        %v1838 = vsel %vm1815, %v1805, %v964
        %v1839 = vsel %vm1815, %v1806, %v966
        %v1840 = vsel %vm1815, %v1807, %v968
        %v1841 = vsel %vm1815, %v1808, %v970
        %v1842 = vsel %vm1815, %v1809, %v972
        %v1843 = vsel %vm1815, %v1810, %v974
        %v1844 = vsel %vm1815, %v1811, %v976
        %v1845 = vsel %vm1815, %v1812, %v978
        %v1846 = vsel %vm1815, %v1813, %v980
        %v1847 = vsel %vm1815, %v1814, %v982
        %vm1848 = vcmask 97280
        %v1849 = vsel %vm1848, %v1816, %v1048
        %v1850 = vsel %vm1848, %v1817, %v1050
        %v1851 = vsel %vm1848, %v1818, %v1052
        %v1852 = vsel %vm1848, %v1819, %v1054
        %v1853 = vsel %vm1848, %v1820, %v1056
        %v1854 = vsel %vm1848, %v1821, %v1058
        %v1855 = vsel %vm1848, %v1822, %v1060
        %v1856 = vsel %vm1848, %v1823, %v1062
        %v1857 = vsel %vm1848, %v1824, %v1064
        %v1858 = vsel %vm1848, %v1825, %v1066
        %v1859 = vsel %vm1848, %v1826, %v1068
        %v1860 = vsel %vm1848, %v1827, %v1070
        %v1861 = vsel %vm1848, %v1828, %v1072
        %v1862 = vsel %vm1848, %v1829, %v1074
        %v1863 = vsel %vm1848, %v1830, %v1076
        %v1864 = vsel %vm1848, %v1831, %v1078
        %v1865 = vsel %vm1848, %v1832, %v1080
        %v1866 = vsel %vm1848, %v1833, %v1082
        %v1867 = vsel %vm1848, %v1834, %v1084
        %v1868 = vsel %vm1848, %v1835, %v1086
        %v1869 = vsel %vm1848, %v1836, %v1088
        %v1870 = vsel %vm1848, %v1837, %v1090
        %v1871 = vsel %vm1848, %v1838, %v1092
        %v1872 = vsel %vm1848, %v1839, %v1094
        %v1873 = vsel %vm1848, %v1840, %v1096
        %v1874 = vsel %vm1848, %v1841, %v1098
        %v1875 = vsel %vm1848, %v1842, %v1100
        %v1876 = vsel %vm1848, %v1843, %v1102
        %v1877 = vsel %vm1848, %v1844, %v1104
        %v1878 = vsel %vm1848, %v1845, %v1106
        %v1879 = vsel %vm1848, %v1846, %v1108
        %v1880 = vsel %vm1848, %v1847, %v1110
        %vm1881 = vcmask 130048
        %v1882 = vsel %vm1881, %v1849, %v1176
        %v1883 = vsel %vm1881, %v1850, %v1178
        %v1884 = vsel %vm1881, %v1851, %v1180
        %v1885 = vsel %vm1881, %v1852, %v1182
        %v1886 = vsel %vm1881, %v1853, %v1184
        %v1887 = vsel %vm1881, %v1854, %v1186
        %v1888 = vsel %vm1881, %v1855, %v1188
        %v1889 = vsel %vm1881, %v1856, %v1190
        %v1890 = vsel %vm1881, %v1857, %v1192
        %v1891 = vsel %vm1881, %v1858, %v1194
        %v1892 = vsel %vm1881, %v1859, %v1196
        %v1893 = vsel %vm1881, %v1860, %v1198
        %v1894 = vsel %vm1881, %v1861, %v1200
        %v1895 = vsel %vm1881, %v1862, %v1202
        %v1896 = vsel %vm1881, %v1863, %v1204
        %v1897 = vsel %vm1881, %v1864, %v1206
        %v1898 = vsel %vm1881, %v1865, %v1208
        %v1899 = vsel %vm1881, %v1866, %v1210
        %v1900 = vsel %vm1881, %v1867, %v1212
        %v1901 = vsel %vm1881, %v1868, %v1214
        %v1902 = vsel %vm1881, %v1869, %v1216
        %v1903 = vsel %vm1881, %v1870, %v1218
        %v1904 = vsel %vm1881, %v1871, %v1220
        %v1905 = vsel %vm1881, %v1872, %v1222
        %v1906 = vsel %vm1881, %v1873, %v1224
        %v1907 = vsel %vm1881, %v1874, %v1226
        %v1908 = vsel %vm1881, %v1875, %v1228
        %v1909 = vsel %vm1881, %v1876, %v1230
        %v1910 = vsel %vm1881, %v1877, %v1232
        %v1911 = vsel %vm1881, %v1878, %v1234
        %v1912 = vsel %vm1881, %v1879, %v1236
        %v1913 = vsel %vm1881, %v1880, %v1238
        %vm1914 = vcmask 162816
        %v1915 = vsel %vm1914, %v1882, %v1304
        %v1916 = vsel %vm1914, %v1883, %v1306
        %v1917 = vsel %vm1914, %v1884, %v1308
        %v1918 = vsel %vm1914, %v1885, %v1310
        %v1919 = vsel %vm1914, %v1886, %v1312
        %v1920 = vsel %vm1914, %v1887, %v1314
        %v1921 = vsel %vm1914, %v1888, %v1316
        %v1922 = vsel %vm1914, %v1889, %v1318
        %v1923 = vsel %vm1914, %v1890, %v1320
        %v1924 = vsel %vm1914, %v1891, %v1322
        %v1925 = vsel %vm1914, %v1892, %v1324
        %v1926 = vsel %vm1914, %v1893, %v1326
        %v1927 = vsel %vm1914, %v1894, %v1328
        %v1928 = vsel %vm1914, %v1895, %v1330
        %v1929 = vsel %vm1914, %v1896, %v1332
        %v1930 = vsel %vm1914, %v1897, %v1334
        %v1931 = vsel %vm1914, %v1898, %v1336
        %v1932 = vsel %vm1914, %v1899, %v1338
        %v1933 = vsel %vm1914, %v1900, %v1340
        %v1934 = vsel %vm1914, %v1901, %v1342
        %v1935 = vsel %vm1914, %v1902, %v1344
        %v1936 = vsel %vm1914, %v1903, %v1346
        %v1937 = vsel %vm1914, %v1904, %v1348
        %v1938 = vsel %vm1914, %v1905, %v1350
        %v1939 = vsel %vm1914, %v1906, %v1352
        %v1940 = vsel %vm1914, %v1907, %v1354
        %v1941 = vsel %vm1914, %v1908, %v1356
        %v1942 = vsel %vm1914, %v1909, %v1358
        %v1943 = vsel %vm1914, %v1910, %v1360
        %v1944 = vsel %vm1914, %v1911, %v1362
        %v1945 = vsel %vm1914, %v1912, %v1364
        %v1946 = vsel %vm1914, %v1913, %v1366
        %vm1947 = vcmask 195584
        %v1948 = vsel %vm1947, %v1915, %v1432
        %v1949 = vsel %vm1947, %v1916, %v1434
        %v1950 = vsel %vm1947, %v1917, %v1436
        %v1951 = vsel %vm1947, %v1918, %v1438
        %v1952 = vsel %vm1947, %v1919, %v1440
        %v1953 = vsel %vm1947, %v1920, %v1442
        %v1954 = vsel %vm1947, %v1921, %v1444
        %v1955 = vsel %vm1947, %v1922, %v1446
        %v1956 = vsel %vm1947, %v1923, %v1448
        %v1957 = vsel %vm1947, %v1924, %v1450
        %v1958 = vsel %vm1947, %v1925, %v1452
        %v1959 = vsel %vm1947, %v1926, %v1454
        %v1960 = vsel %vm1947, %v1927, %v1456
        %v1961 = vsel %vm1947, %v1928, %v1458
        %v1962 = vsel %vm1947, %v1929, %v1460
        %v1963 = vsel %vm1947, %v1930, %v1462
        %v1964 = vsel %vm1947, %v1931, %v1464
        %v1965 = vsel %vm1947, %v1932, %v1466
        %v1966 = vsel %vm1947, %v1933, %v1468
        %v1967 = vsel %vm1947, %v1934, %v1470
        %v1968 = vsel %vm1947, %v1935, %v1472
        %v1969 = vsel %vm1947, %v1936, %v1474
        %v1970 = vsel %vm1947, %v1937, %v1476
        %v1971 = vsel %vm1947, %v1938, %v1478
        %v1972 = vsel %vm1947, %v1939, %v1480
        %v1973 = vsel %vm1947, %v1940, %v1482
        %v1974 = vsel %vm1947, %v1941, %v1484
        %v1975 = vsel %vm1947, %v1942, %v1486
        %v1976 = vsel %vm1947, %v1943, %v1488
        %v1977 = vsel %vm1947, %v1944, %v1490
        %v1978 = vsel %vm1947, %v1945, %v1492
        %v1979 = vsel %vm1947, %v1946, %v1494
        %vm1980 = vcmask 228352
        %v1981 = vsel %vm1980, %v1948, %v1560
        %v1982 = vsel %vm1980, %v1949, %v1562
        %v1983 = vsel %vm1980, %v1950, %v1564
        %v1984 = vsel %vm1980, %v1951, %v1566
        %v1985 = vsel %vm1980, %v1952, %v1568
        %v1986 = vsel %vm1980, %v1953, %v1570
        %v1987 = vsel %vm1980, %v1954, %v1572
        %v1988 = vsel %vm1980, %v1955, %v1574
        %v1989 = vsel %vm1980, %v1956, %v1576
        %v1990 = vsel %vm1980, %v1957, %v1578
        %v1991 = vsel %vm1980, %v1958, %v1580
        %v1992 = vsel %vm1980, %v1959, %v1582
        %v1993 = vsel %vm1980, %v1960, %v1584
        %v1994 = vsel %vm1980, %v1961, %v1586
        %v1995 = vsel %vm1980, %v1962, %v1588
        %v1996 = vsel %vm1980, %v1963, %v1590
        %v1997 = vsel %vm1980, %v1964, %v1592
        %v1998 = vsel %vm1980, %v1965, %v1594
        %v1999 = vsel %vm1980, %v1966, %v1596
        %v2000 = vsel %vm1980, %v1967, %v1598
        %v2001 = vsel %vm1980, %v1968, %v1600
        %v2002 = vsel %vm1980, %v1969, %v1602
        %v2003 = vsel %vm1980, %v1970, %v1604
        %v2004 = vsel %vm1980, %v1971, %v1606
        %v2005 = vsel %vm1980, %v1972, %v1608
        %v2006 = vsel %vm1980, %v1973, %v1610
        %v2007 = vsel %vm1980, %v1974, %v1612
        %v2008 = vsel %vm1980, %v1975, %v1614
        %v2009 = vsel %vm1980, %v1976, %v1616
        %v2010 = vsel %vm1980, %v1977, %v1618
        %v2011 = vsel %vm1980, %v1978, %v1620
        %v2012 = vsel %vm1980, %v1979, %v1622
        %vm2013 = vcmask 261120
        %v2014 = vsel %vm2013, %v1981, %v1688
        %v2015 = vsel %vm2013, %v1982, %v1690
        %v2016 = vsel %vm2013, %v1983, %v1692
        %v2017 = vsel %vm2013, %v1984, %v1694
        %v2018 = vsel %vm2013, %v1985, %v1696
        %v2019 = vsel %vm2013, %v1986, %v1698
        %v2020 = vsel %vm2013, %v1987, %v1700
        %v2021 = vsel %vm2013, %v1988, %v1702
        %v2022 = vsel %vm2013, %v1989, %v1704
        %v2023 = vsel %vm2013, %v1990, %v1706
        %v2024 = vsel %vm2013, %v1991, %v1708
        %v2025 = vsel %vm2013, %v1992, %v1710
        %v2026 = vsel %vm2013, %v1993, %v1712
        %v2027 = vsel %vm2013, %v1994, %v1714
        %v2028 = vsel %vm2013, %v1995, %v1716
        %v2029 = vsel %vm2013, %v1996, %v1718
        %v2030 = vsel %vm2013, %v1997, %v1720
        %v2031 = vsel %vm2013, %v1998, %v1722
        %v2032 = vsel %vm2013, %v1999, %v1724
        %v2033 = vsel %vm2013, %v2000, %v1726
        %v2034 = vsel %vm2013, %v2001, %v1728
        %v2035 = vsel %vm2013, %v2002, %v1730
        %v2036 = vsel %vm2013, %v2003, %v1732
        %v2037 = vsel %vm2013, %v2004, %v1734
        %v2038 = vsel %vm2013, %v2005, %v1736
        %v2039 = vsel %vm2013, %v2006, %v1738
        %v2040 = vsel %vm2013, %v2007, %v1740
        %v2041 = vsel %vm2013, %v2008, %v1742
        %v2042 = vsel %vm2013, %v2009, %v1744
        %v2043 = vsel %vm2013, %v2010, %v1746
        %v2044 = vsel %vm2013, %v2011, %v1748
        %v2045 = vsel %vm2013, %v2012, %v1750
        %v2046 = vld [vmem:[%s1] sm:$0xff]
        %v2047 = vld [vmem:[%s1 + $0x8] sm:$0xff]
        %v2048 = vld [vmem:[%s1 + $0x10] sm:$0xff]
        %v2049 = vld [vmem:[%s1 + $0x18] sm:$0xff]
        %v2050 = vld [vmem:[%s1 + $0x20] sm:$0xf]
        %vm2051 = vcmask 293888
        %v2053 = vsel %vm2051, %v2014, 0
        %v2056 = vsel %vm2051, %v2015, 0
        %v2059 = vsel %vm2051, %v2016, 0
        %v2062 = vsel %vm2051, %v2017, 0
        %v2065 = vsel %vm2051, %v2018, 0
        %v2068 = vsel %vm2051, %v2019, 0
        %v2071 = vsel %vm2051, %v2020, 0
        %v2074 = vsel %vm2051, %v2021, 0
        %v2077 = vsel %vm2051, %v2022, 0
        %v2080 = vsel %vm2051, %v2023, 0
        %v2083 = vsel %vm2051, %v2024, 0
        %v2086 = vsel %vm2051, %v2025, 0
        %v2089 = vsel %vm2051, %v2026, 0
        %v2092 = vsel %vm2051, %v2027, 0
        %v2095 = vsel %vm2051, %v2028, 0
        %v2098 = vsel %vm2051, %v2029, 0
        %v2101 = vsel %vm2051, %v2030, 0
        %v2104 = vsel %vm2051, %v2031, 0
        %v2107 = vsel %vm2051, %v2032, 0
        %v2110 = vsel %vm2051, %v2033, 0
        %v2113 = vsel %vm2051, %v2034, 0
        %v2116 = vsel %vm2051, %v2035, 0
        %v2119 = vsel %vm2051, %v2036, 0
        %v2122 = vsel %vm2051, %v2037, 0
        %v2125 = vsel %vm2051, %v2038, 0
        %v2128 = vsel %vm2051, %v2039, 0
        %v2131 = vsel %vm2051, %v2040, 0
        %v2134 = vsel %vm2051, %v2041, 0
        %v2137 = vsel %vm2051, %v2042, 0
        %v2140 = vsel %vm2051, %v2043, 0
        %v2143 = vsel %vm2051, %v2044, 0
        %v2146 = vsel %vm2051, %v2045, 0
        %vm2148 = vcmask 1043456
        %v2150 = vsel %vm2148, %v2050, 0
        %2152 = vmatprep.subr.mxu0 0.0
        %2153 = vmatpush1.msra.mxu0 %v2046
        %2154 = vmatprep.subr.mxu0 0.0
        %2155 = vmatpush1.msra.mxu0 %v2047
        %2156 = vmatprep.subr.mxu0 0.0
        %2157 = vmatpush1.msra.mxu0 %v2048
        %2158 = vmatprep.subr.mxu0 0.0
        %2159 = vmatpush1.msra.mxu0 %v2049
        %2160 = vmatprep.subr.mxu0 0.0
        %2161 = vmatpush1.msra.mxu0 %v2150
        %2162 = vmatprep.subr.mxu0 0.0
        %2163 = vmatpush1.msra.mxu0 0.0
        %2164 = vmatprep.subr.mxu0 0.0
        %2165 = vmatpush1.msra.mxu0 0.0
        %2166 = vmatprep.subr.mxu0 0.0
        %2167 = vmatpush1.msra.mxu0 0.0
        %2168 = vmatprep.subr.mxu0 0.0
        %2169 = vmatpush1.msra.mxu0 0.0
        %2170 = vmatprep.subr.mxu0 0.0
        %2171 = vmatpush1.msra.mxu0 0.0
        %2172 = vmatprep.subr.mxu0 0.0
        %2173 = vmatpush1.msra.mxu0 0.0
        %2174 = vmatprep.subr.mxu0 0.0
        %2175 = vmatpush1.msra.mxu0 0.0
        %2176 = vmatprep.subr.mxu0 0.0
        %2177 = vmatpush1.msra.mxu0 0.0
        %2178 = vmatprep.subr.mxu0 0.0
        %2179 = vmatpush1.msra.mxu0 0.0
        %2180 = vmatprep.subr.mxu0 0.0
        %2181 = vmatpush1.msra.mxu0 0.0
        %2182 = vmatprep.subr.mxu0 0.0
        %2183 = vmatpush1.msra.mxu0 0.0
        %2184 = vmatprep.subr.mxu0 0.0
        %2185 = vmatpush1.msra.mxu0 0.0
        %2186 = vmatprep.subr.mxu0 0.0
        %2187 = vmatpush1.msra.mxu0 0.0
        %2188 = vmatprep.subr.mxu0 0.0
        %2189 = vmatpush1.msra.mxu0 0.0
        %2190 = vmatprep.subr.mxu0 0.0
        %2191 = vmatpush1.msra.mxu0 0.0
        %2192 = vmatprep.subr.mxu0 0.0
        %2193 = vmatpush1.msra.mxu0 0.0
        %2194 = vmatprep.subr.mxu0 0.0
        %2195 = vmatpush1.msra.mxu0 0.0
        %2196 = vmatprep.subr.mxu0 0.0
        %2197 = vmatpush1.msra.mxu0 0.0
        %2198 = vmatprep.subr.mxu0 0.0
        %2199 = vmatpush1.msra.mxu0 0.0
        %2200 = vmatprep.subr.mxu0 0.0
        %2201 = vmatpush1.msra.mxu0 0.0
        %2202 = vmatprep.subr.mxu0 0.0
        %2203 = vmatpush1.msra.mxu0 0.0
        %2204 = vmatprep.subr.mxu0 0.0
        %2205 = vmatpush1.msra.mxu0 0.0
        %2206 = vmatprep.subr.mxu0 0.0
        %2207 = vmatpush1.msra.mxu0 0.0
        %2208 = vmatprep.subr.mxu0 0.0
        %2209 = vmatpush1.msra.mxu0 0.0
        %2210 = vmatprep.subr.mxu0 0.0
        %2211 = vmatpush1.msra.mxu0 0.0
        %2212 = vmatprep.subr.mxu0 0.0
        %2213 = vmatpush1.msra.mxu0 0.0
        %2214 = vmatprep.subr.mxu0 0.0
        %2215 = vmatpush1.msra.mxu0 0.0
        %2216 = vmatprep.mubr.f32.mxu0 0.0
        %2217 = vmatmul.mubr.f32.gmra.mrb[0].mxu0 %v2053
        %v2218 = vpop.f32.mrb[0].mxu0
        %v2219 = vadd.f32 0.0, %v2218
        %v2220 = vpop.f32.mrb[0].mxu0
        %2221 = vmatprep.mubr.f32.mxu0 0.0
        %2222 = vmatmul.mubr.f32.gmra.mrb[0].mxu0 %v2056
        %v2223 = vpop.f32.mrb[0].mxu0
        %v2224 = vadd.f32 0.0, %v2223
        %v2225 = vpop.f32.mrb[0].mxu0
        %2226 = vmatprep.mubr.f32.mxu0 0.0
        %2227 = vmatmul.mubr.f32.gmra.mrb[0].mxu0 %v2059
        %v2228 = vpop.f32.mrb[0].mxu0
        %v2229 = vadd.f32 0.0, %v2228
        %v2230 = vpop.f32.mrb[0].mxu0
        %2231 = vmatprep.mubr.f32.mxu0 0.0
        %2232 = vmatmul.mubr.f32.gmra.mrb[0].mxu0 %v2062
        %v2233 = vpop.f32.mrb[0].mxu0
        %v2234 = vadd.f32 0.0, %v2233
        %v2235 = vpop.f32.mrb[0].mxu0
        %2236 = vmatprep.mubr.f32.mxu0 0.0
        %2237 = vmatmul.mubr.f32.gmra.mrb[0].mxu0 %v2065
        %v2238 = vpop.f32.mrb[0].mxu0
        %v2239 = vadd.f32 0.0, %v2238
        %v2240 = vpop.f32.mrb[0].mxu0
        %2241 = vmatprep.mubr.f32.mxu0 0.0
        %2242 = vmatmul.mubr.f32.gmra.mrb[0].mxu0 %v2068
        %v2243 = vpop.f32.mrb[0].mxu0
        %v2244 = vadd.f32 0.0, %v2243
        %v2245 = vpop.f32.mrb[0].mxu0
        %2246 = vmatprep.mubr.f32.mxu0 0.0
        %2247 = vmatmul.mubr.f32.gmra.mrb[0].mxu0 %v2071
        %v2248 = vpop.f32.mrb[0].mxu0
        %v2249 = vadd.f32 0.0, %v2248
        %v2250 = vpop.f32.mrb[0].mxu0
        %2251 = vmatprep.mubr.f32.mxu0 0.0
        %2252 = vmatmul.mubr.f32.gmra.mrb[0].mxu0 %v2074
        %v2253 = vpop.f32.mrb[0].mxu0
        %v2254 = vadd.f32 0.0, %v2253
        %v2255 = vpop.f32.mrb[0].mxu0
        %2256 = vmatprep.mubr.f32.mxu0 0.0
        %2257 = vmatmul.mubr.f32.gmra.mrb[0].mxu0 %v2077
        %v2258 = vpop.f32.mrb[0].mxu0
        %v2259 = vadd.f32 0.0, %v2258
        %v2260 = vpop.f32.mrb[0].mxu0
        %2261 = vmatprep.mubr.f32.mxu0 0.0
        %2262 = vmatmul.mubr.f32.gmra.mrb[0].mxu0 %v2080
        %v2263 = vpop.f32.mrb[0].mxu0
        %v2264 = vadd.f32 0.0, %v2263
        %v2265 = vpop.f32.mrb[0].mxu0
        %2266 = vmatprep.mubr.f32.mxu0 0.0
        %2267 = vmatmul.mubr.f32.gmra.mrb[0].mxu0 %v2083
        %v2268 = vpop.f32.mrb[0].mxu0
        %v2269 = vadd.f32 0.0, %v2268
        %v2270 = vpop.f32.mrb[0].mxu0
        %2271 = vmatprep.mubr.f32.mxu0 0.0
        %2272 = vmatmul.mubr.f32.gmra.mrb[0].mxu0 %v2086
        %v2273 = vpop.f32.mrb[0].mxu0
        %v2274 = vadd.f32 0.0, %v2273
        %v2275 = vpop.f32.mrb[0].mxu0
        %2276 = vmatprep.mubr.f32.mxu0 0.0
        %2277 = vmatmul.mubr.f32.gmra.mrb[0].mxu0 %v2089
        %v2278 = vpop.f32.mrb[0].mxu0
        %v2279 = vadd.f32 0.0, %v2278
        %v2280 = vpop.f32.mrb[0].mxu0
        %2281 = vmatprep.mubr.f32.mxu0 0.0
        %2282 = vmatmul.mubr.f32.gmra.mrb[0].mxu0 %v2092
        %v2283 = vpop.f32.mrb[0].mxu0
        %v2284 = vadd.f32 0.0, %v2283
        %v2285 = vpop.f32.mrb[0].mxu0
        %2286 = vmatprep.mubr.f32.mxu0 0.0
        %2287 = vmatmul.mubr.f32.gmra.mrb[0].mxu0 %v2095
        %v2288 = vpop.f32.mrb[0].mxu0
        %v2289 = vadd.f32 0.0, %v2288
        %v2290 = vpop.f32.mrb[0].mxu0
        %2291 = vmatprep.mubr.f32.mxu0 0.0
        %2292 = vmatmul.mubr.f32.gmra.mrb[0].mxu0 %v2098
        %v2293 = vpop.f32.mrb[0].mxu0
        %v2294 = vadd.f32 0.0, %v2293
        %v2295 = vpop.f32.mrb[0].mxu0
        %2296 = vmatprep.mubr.f32.mxu0 0.0
        %2297 = vmatmul.mubr.f32.gmra.mrb[0].mxu0 %v2101
        %v2298 = vpop.f32.mrb[0].mxu0
        %v2299 = vadd.f32 0.0, %v2298
        %v2300 = vpop.f32.mrb[0].mxu0
        %2301 = vmatprep.mubr.f32.mxu0 0.0
        %2302 = vmatmul.mubr.f32.gmra.mrb[0].mxu0 %v2104
        %v2303 = vpop.f32.mrb[0].mxu0
        %v2304 = vadd.f32 0.0, %v2303
        %v2305 = vpop.f32.mrb[0].mxu0
        %2306 = vmatprep.mubr.f32.mxu0 0.0
        %2307 = vmatmul.mubr.f32.gmra.mrb[0].mxu0 %v2107
        %v2308 = vpop.f32.mrb[0].mxu0
        %v2309 = vadd.f32 0.0, %v2308
        %v2310 = vpop.f32.mrb[0].mxu0
        %2311 = vmatprep.mubr.f32.mxu0 0.0
        %2312 = vmatmul.mubr.f32.gmra.mrb[0].mxu0 %v2110
        %v2313 = vpop.f32.mrb[0].mxu0
        %v2314 = vadd.f32 0.0, %v2313
        %v2315 = vpop.f32.mrb[0].mxu0
        %2316 = vmatprep.mubr.f32.mxu0 0.0
        %2317 = vmatmul.mubr.f32.gmra.mrb[0].mxu0 %v2113
        %v2318 = vpop.f32.mrb[0].mxu0
        %v2319 = vadd.f32 0.0, %v2318
        %v2320 = vpop.f32.mrb[0].mxu0
        %2321 = vmatprep.mubr.f32.mxu0 0.0
        %2322 = vmatmul.mubr.f32.gmra.mrb[0].mxu0 %v2116
        %v2323 = vpop.f32.mrb[0].mxu0
        %v2324 = vadd.f32 0.0, %v2323
        %v2325 = vpop.f32.mrb[0].mxu0
        %2326 = vmatprep.mubr.f32.mxu0 0.0
        %2327 = vmatmul.mubr.f32.gmra.mrb[0].mxu0 %v2119
        %v2328 = vpop.f32.mrb[0].mxu0
        %v2329 = vadd.f32 0.0, %v2328
        %v2330 = vpop.f32.mrb[0].mxu0
        %2331 = vmatprep.mubr.f32.mxu0 0.0
        %2332 = vmatmul.mubr.f32.gmra.mrb[0].mxu0 %v2122
        %v2333 = vpop.f32.mrb[0].mxu0
        %v2334 = vadd.f32 0.0, %v2333
        %v2335 = vpop.f32.mrb[0].mxu0
        %2336 = vmatprep.mubr.f32.mxu0 0.0
        %2337 = vmatmul.mubr.f32.gmra.mrb[0].mxu0 %v2125
        %v2338 = vpop.f32.mrb[0].mxu0
        %v2339 = vadd.f32 0.0, %v2338
        %v2340 = vpop.f32.mrb[0].mxu0
        %2341 = vmatprep.mubr.f32.mxu0 0.0
        %2342 = vmatmul.mubr.f32.gmra.mrb[0].mxu0 %v2128
        %v2343 = vpop.f32.mrb[0].mxu0
        %v2344 = vadd.f32 0.0, %v2343
        %v2345 = vpop.f32.mrb[0].mxu0
        %2346 = vmatprep.mubr.f32.mxu0 0.0
        %2347 = vmatmul.mubr.f32.gmra.mrb[0].mxu0 %v2131
        %v2348 = vpop.f32.mrb[0].mxu0
        %v2349 = vadd.f32 0.0, %v2348
        %v2350 = vpop.f32.mrb[0].mxu0
        %2351 = vmatprep.mubr.f32.mxu0 0.0
        %2352 = vmatmul.mubr.f32.gmra.mrb[0].mxu0 %v2134
        %v2353 = vpop.f32.mrb[0].mxu0
        %v2354 = vadd.f32 0.0, %v2353
        %v2355 = vpop.f32.mrb[0].mxu0
        %2356 = vmatprep.mubr.f32.mxu0 0.0
        %2357 = vmatmul.mubr.f32.gmra.mrb[0].mxu0 %v2137
        %v2358 = vpop.f32.mrb[0].mxu0
        %v2359 = vadd.f32 0.0, %v2358
        %v2360 = vpop.f32.mrb[0].mxu0
        %2361 = vmatprep.mubr.f32.mxu0 0.0
        %2362 = vmatmul.mubr.f32.gmra.mrb[0].mxu0 %v2140
        %v2363 = vpop.f32.mrb[0].mxu0
        %v2364 = vadd.f32 0.0, %v2363
        %v2365 = vpop.f32.mrb[0].mxu0
        %2366 = vmatprep.mubr.f32.mxu0 0.0
        %2367 = vmatmul.mubr.f32.gmra.mrb[0].mxu0 %v2143
        %v2368 = vpop.f32.mrb[0].mxu0
        %v2369 = vadd.f32 0.0, %v2368
        %v2370 = vpop.f32.mrb[0].mxu0
        %2371 = vmatprep.mubr.f32.mxu0 0.0
        %2372 = vmatmul.mubr.f32.gmra.mrb[0].mxu0 %v2146
        %v2373 = vpop.f32.mrb[0].mxu0
        %v2374 = vadd.f32 0.0, %v2373
        %v2375 = vpop.f32.mrb[0].mxu0
        %2376 = vdwg.mxu0
        %2377 = vst.msk [vmem:[%s270] sm:$0xff] %vm1815, %v2219
        %2378 = vst.msk [vmem:[%s270 + $0x8] sm:$0xff] %vm1815, %v2224
        %2379 = vst.msk [vmem:[%s270 + $0x10] sm:$0xff] %vm1815, %v2229
        %2380 = vst.msk [vmem:[%s270 + $0x18] sm:$0xff] %vm1815, %v2234
        %2381 = vst.msk [vmem:[%s270 + $0x20] sm:$0xff] %vm1815, %v2239
        %2382 = vst.msk [vmem:[%s270 + $0x28] sm:$0xff] %vm1815, %v2244
        %2383 = vst.msk [vmem:[%s270 + $0x30] sm:$0xff] %vm1815, %v2249
        %2384 = vst.msk [vmem:[%s270 + $0x38] sm:$0xff] %vm1815, %v2254
        %2385 = vst.msk [vmem:[%s270 + $0x40] sm:$0xff] %vm1815, %v2259
        %2386 = vst.msk [vmem:[%s270 + $0x48] sm:$0xff] %vm1815, %v2264
        %2387 = vst.msk [vmem:[%s270 + $0x50] sm:$0xff] %vm1815, %v2269
        %2388 = vst.msk [vmem:[%s270 + $0x58] sm:$0xff] %vm1815, %v2274
        %2389 = vst.msk [vmem:[%s270 + $0x60] sm:$0xff] %vm1815, %v2279
        %2390 = vst.msk [vmem:[%s270 + $0x68] sm:$0xff] %vm1815, %v2284
        %2391 = vst.msk [vmem:[%s270 + $0x70] sm:$0xff] %vm1815, %v2289
        %2392 = vst.msk [vmem:[%s270 + $0x78] sm:$0xff] %vm1815, %v2294
        %2393 = vst.msk [vmem:[%s270 + $0x80] sm:$0xff] %vm1815, %v2299
        %2394 = vst.msk [vmem:[%s270 + $0x88] sm:$0xff] %vm1815, %v2304
        %2395 = vst.msk [vmem:[%s270 + $0x90] sm:$0xff] %vm1815, %v2309
        %2396 = vst.msk [vmem:[%s270 + $0x98] sm:$0xff] %vm1815, %v2314
        %2397 = vst.msk [vmem:[%s270 + $0xa0] sm:$0xff] %vm1815, %v2319
        %2398 = vst.msk [vmem:[%s270 + $0xa8] sm:$0xff] %vm1815, %v2324
        %2399 = vst.msk [vmem:[%s270 + $0xb0] sm:$0xff] %vm1815, %v2329
        %2400 = vst.msk [vmem:[%s270 + $0xb8] sm:$0xff] %vm1815, %v2334
        %2401 = vst.msk [vmem:[%s270 + $0xc0] sm:$0xff] %vm1815, %v2339
        %2402 = vst.msk [vmem:[%s270 + $0xc8] sm:$0xff] %vm1815, %v2344
        %2403 = vst.msk [vmem:[%s270 + $0xd0] sm:$0xff] %vm1815, %v2349
        %2404 = vst.msk [vmem:[%s270 + $0xd8] sm:$0xff] %vm1815, %v2354
        %2405 = vst.msk [vmem:[%s270 + $0xe0] sm:$0xff] %vm1815, %v2359
        %2406 = vst.msk [vmem:[%s270 + $0xe8] sm:$0xff] %vm1815, %v2364
        %2407 = vst.msk [vmem:[%s270 + $0xf0] sm:$0xff] %vm1815, %v2369
        %2408 = vst.msk [vmem:[%s270 + $0xf8] sm:$0xff] %vm1815, %v2374
        %v2409 = vsel %vm1815, %v2219, 0.0
        %v2410 = vsel %vm1815, %v2224, 0.0
        %v2411 = vadd.f32 %v2409, %v2410
        %v2412 = vsel %vm1815, %v2229, 0.0
        %v2413 = vadd.f32 %v2411, %v2412
        %v2414 = vsel %vm1815, %v2234, 0.0
        %v2415 = vadd.f32 %v2413, %v2414
        %v2416 = vsel %vm1815, %v2239, 0.0
        %v2417 = vadd.f32 %v2415, %v2416
        %v2418 = vsel %vm1815, %v2244, 0.0
        %v2419 = vadd.f32 %v2417, %v2418
        %v2420 = vsel %vm1815, %v2249, 0.0
        %v2421 = vadd.f32 %v2419, %v2420
        %v2422 = vsel %vm1815, %v2254, 0.0
        %v2423 = vadd.f32 %v2421, %v2422
        %v2424 = vsel %vm1815, %v2259, 0.0
        %v2425 = vadd.f32 %v2423, %v2424
        %v2426 = vsel %vm1815, %v2264, 0.0
        %v2427 = vadd.f32 %v2425, %v2426
        %v2428 = vsel %vm1815, %v2269, 0.0
        %v2429 = vadd.f32 %v2427, %v2428
        %v2430 = vsel %vm1815, %v2274, 0.0
        %v2431 = vadd.f32 %v2429, %v2430
        %v2432 = vsel %vm1815, %v2279, 0.0
        %v2433 = vadd.f32 %v2431, %v2432
        %v2434 = vsel %vm1815, %v2284, 0.0
        %v2435 = vadd.f32 %v2433, %v2434
        %v2436 = vsel %vm1815, %v2289, 0.0
        %v2437 = vadd.f32 %v2435, %v2436
        %v2438 = vsel %vm1815, %v2294, 0.0
        %v2439 = vadd.f32 %v2437, %v2438
        %v2440 = vsel %vm1815, %v2299, 0.0
        %v2441 = vadd.f32 %v2439, %v2440
        %v2442 = vsel %vm1815, %v2304, 0.0
        %v2443 = vadd.f32 %v2441, %v2442
        %v2444 = vsel %vm1815, %v2309, 0.0
        %v2445 = vadd.f32 %v2443, %v2444
        %v2446 = vsel %vm1815, %v2314, 0.0
        %v2447 = vadd.f32 %v2445, %v2446
        %v2448 = vsel %vm1815, %v2319, 0.0
        %v2449 = vadd.f32 %v2447, %v2448
        %v2450 = vsel %vm1815, %v2324, 0.0
        %v2451 = vadd.f32 %v2449, %v2450
        %v2452 = vsel %vm1815, %v2329, 0.0
        %v2453 = vadd.f32 %v2451, %v2452
        %v2454 = vsel %vm1815, %v2334, 0.0
        %v2455 = vadd.f32 %v2453, %v2454
        %v2456 = vsel %vm1815, %v2339, 0.0
        %v2457 = vadd.f32 %v2455, %v2456
        %v2458 = vsel %vm1815, %v2344, 0.0
        %v2459 = vadd.f32 %v2457, %v2458
        %v2460 = vsel %vm1815, %v2349, 0.0
        %v2461 = vadd.f32 %v2459, %v2460
        %v2462 = vsel %vm1815, %v2354, 0.0
        %v2463 = vadd.f32 %v2461, %v2462
        %v2464 = vsel %vm1815, %v2359, 0.0
        %v2465 = vadd.f32 %v2463, %v2464
        %v2466 = vsel %vm1815, %v2364, 0.0
        %v2467 = vadd.f32 %v2465, %v2466
        %v2468 = vsel %vm1815, %v2369, 0.0
        %v2469 = vadd.f32 %v2467, %v2468
        %v2470 = vsel %vm1815, %v2374, 0.0
        %v2471 = vadd.f32 %v2469, %v2470
        %v2472 = vrot.slane %v2471, 4
        %v2473 = vadd.f32 %v2471, %v2472
        %v2474 = vrot.slane %v2473, 2
        %v2475 = vadd.f32 %v2473, %v2474
        %v2476 = vrot.slane %v2475, 1
        %v2477 = vadd.f32 %v2475, %v2476
        %vm2478 = vcmask 57344
        %2479 = vst.msk [vmem:[%s254] sm:$0x1] %vm2478, %v2477
        %v2480 = vmul.f32 %v2219, %v2219
        %v2481 = vmul.f32 %v2224, %v2224
        %v2482 = vmul.f32 %v2229, %v2229
        %v2483 = vmul.f32 %v2234, %v2234
        %v2484 = vmul.f32 %v2239, %v2239
        %v2485 = vmul.f32 %v2244, %v2244
        %v2486 = vmul.f32 %v2249, %v2249
        %v2487 = vmul.f32 %v2254, %v2254
        %v2488 = vmul.f32 %v2259, %v2259
        %v2489 = vmul.f32 %v2264, %v2264
        %v2490 = vmul.f32 %v2269, %v2269
        %v2491 = vmul.f32 %v2274, %v2274
        %v2492 = vmul.f32 %v2279, %v2279
        %v2493 = vmul.f32 %v2284, %v2284
        %v2494 = vmul.f32 %v2289, %v2289
        %v2495 = vmul.f32 %v2294, %v2294
        %v2496 = vmul.f32 %v2299, %v2299
        %v2497 = vmul.f32 %v2304, %v2304
        %v2498 = vmul.f32 %v2309, %v2309
        %v2499 = vmul.f32 %v2314, %v2314
        %v2500 = vmul.f32 %v2319, %v2319
        %v2501 = vmul.f32 %v2324, %v2324
        %v2502 = vmul.f32 %v2329, %v2329
        %v2503 = vmul.f32 %v2334, %v2334
        %v2504 = vmul.f32 %v2339, %v2339
        %v2505 = vmul.f32 %v2344, %v2344
        %v2506 = vmul.f32 %v2349, %v2349
        %v2507 = vmul.f32 %v2354, %v2354
        %v2508 = vmul.f32 %v2359, %v2359
        %v2509 = vmul.f32 %v2364, %v2364
        %v2510 = vmul.f32 %v2369, %v2369
        %v2511 = vmul.f32 %v2374, %v2374
        %v2512 = vsel %vm1815, %v2480, 0.0
        %v2513 = vsel %vm1815, %v2481, 0.0
        %v2514 = vadd.f32 %v2512, %v2513
        %v2515 = vsel %vm1815, %v2482, 0.0
        %v2516 = vadd.f32 %v2514, %v2515
        %v2517 = vsel %vm1815, %v2483, 0.0
        %v2518 = vadd.f32 %v2516, %v2517
        %v2519 = vsel %vm1815, %v2484, 0.0
        %v2520 = vadd.f32 %v2518, %v2519
        %v2521 = vsel %vm1815, %v2485, 0.0
        %v2522 = vadd.f32 %v2520, %v2521
        %v2523 = vsel %vm1815, %v2486, 0.0
        %v2524 = vadd.f32 %v2522, %v2523
        %v2525 = vsel %vm1815, %v2487, 0.0
        %v2526 = vadd.f32 %v2524, %v2525
        %v2527 = vsel %vm1815, %v2488, 0.0
        %v2528 = vadd.f32 %v2526, %v2527
        %v2529 = vsel %vm1815, %v2489, 0.0
        %v2530 = vadd.f32 %v2528, %v2529
        %v2531 = vsel %vm1815, %v2490, 0.0
        %v2532 = vadd.f32 %v2530, %v2531
        %v2533 = vsel %vm1815, %v2491, 0.0
        %v2534 = vadd.f32 %v2532, %v2533
        %v2535 = vsel %vm1815, %v2492, 0.0
        %v2536 = vadd.f32 %v2534, %v2535
        %v2537 = vsel %vm1815, %v2493, 0.0
        %v2538 = vadd.f32 %v2536, %v2537
        %v2539 = vsel %vm1815, %v2494, 0.0
        %v2540 = vadd.f32 %v2538, %v2539
        %v2541 = vsel %vm1815, %v2495, 0.0
        %v2542 = vadd.f32 %v2540, %v2541
        %v2543 = vsel %vm1815, %v2496, 0.0
        %v2544 = vadd.f32 %v2542, %v2543
        %v2545 = vsel %vm1815, %v2497, 0.0
        %v2546 = vadd.f32 %v2544, %v2545
        %v2547 = vsel %vm1815, %v2498, 0.0
        %v2548 = vadd.f32 %v2546, %v2547
        %v2549 = vsel %vm1815, %v2499, 0.0
        %v2550 = vadd.f32 %v2548, %v2549
        %v2551 = vsel %vm1815, %v2500, 0.0
        %v2552 = vadd.f32 %v2550, %v2551
        %v2553 = vsel %vm1815, %v2501, 0.0
        %v2554 = vadd.f32 %v2552, %v2553
        %v2555 = vsel %vm1815, %v2502, 0.0
        %v2556 = vadd.f32 %v2554, %v2555
        %v2557 = vsel %vm1815, %v2503, 0.0
        %v2558 = vadd.f32 %v2556, %v2557
        %v2559 = vsel %vm1815, %v2504, 0.0
        %v2560 = vadd.f32 %v2558, %v2559
        %v2561 = vsel %vm1815, %v2505, 0.0
        %v2562 = vadd.f32 %v2560, %v2561
        %v2563 = vsel %vm1815, %v2506, 0.0
        %v2564 = vadd.f32 %v2562, %v2563
        %v2565 = vsel %vm1815, %v2507, 0.0
        %v2566 = vadd.f32 %v2564, %v2565
        %v2567 = vsel %vm1815, %v2508, 0.0
        %v2568 = vadd.f32 %v2566, %v2567
        %v2569 = vsel %vm1815, %v2509, 0.0
        %v2570 = vadd.f32 %v2568, %v2569
        %v2571 = vsel %vm1815, %v2510, 0.0
        %v2572 = vadd.f32 %v2570, %v2571
        %v2573 = vsel %vm1815, %v2511, 0.0
        %v2574 = vadd.f32 %v2572, %v2573
        %v2575 = vrot.slane %v2574, 4
        %v2576 = vadd.f32 %v2574, %v2575
        %v2577 = vrot.slane %v2576, 2
        %v2578 = vadd.f32 %v2576, %v2577
        %v2579 = vrot.slane %v2578, 1
        %v2580 = vadd.f32 %v2578, %v2579
        %2581 = vst.msk [vmem:[%s260] sm:$0x1] %vm2478, %v2580
        %p2582 = scmp.lt.s32.totalorder %s24, 1
        %s2583 = scalar_select %p2582, %s24, 1
        %s2584 = smul.addr %s2583, 32
        %s2585 = smul.addr %s2584, 8
        %s2586 = scalar_lea.vmem %s4, %s2585
        %s2587 = sand.u32 %s147, 1
        %s2588 = scalar_lea.sflag [#allocation4], %s2587
        %s2589 = sand.u32 %s147, 1
        %s2590 = scalar_lea.vmem [#allocation3], %s2589
        %s2591 = sand.u32 %s173, 1
        %s2592 = scalar_lea.sflag [#allocation6], %s2591
        %s2593 = sand.u32 %s173, 1
        %s2594 = scalar_lea.vmem [#allocation5], %s2593
        // Predicated region
        $region37: #{tpu_custom_call.1} parent=35 // pred_check
          %p2595 = pneg %p131
        $region38: #{tpu_custom_call.1} parent=35 // pred_check_branch
          %2597 = sbr.rel (%p2595) target = $region40
        $region39: #{tpu_custom_call.1} parent=35 // pred_region
          _
        $region40: #{tpu_custom_call.1} parent=35 // pred_fallthru
          _
        // Predicated region
        $region41: #{tpu_custom_call.1} parent=35 // pred_check
          %p2598 = pneg %p157
        $region42: #{tpu_custom_call.1} parent=35 // pred_check_branch
          %2600 = sbr.rel (%p2598) target = $region44
        $region43: #{tpu_custom_call.1} parent=35 // pred_region
          %s2602 = ssub.s32 16, 16
          %2603 = vsyncadd %s2588, %s2602
          %s2604 = smul.addr %s24, 16
          %s2605 = scalar_lea.hbm %s5, %s2604
          %s2607 = sshll.u32 %s2590, 4
          %s2608 = int_to_ptr.vmem [resolvable:$true] %s2607
          %2610 = dma.vmem_to_hbm [thread:$0]  %s2608, 16, %s2605, %s2588
        $region44: #{tpu_custom_call.1} parent=35 // pred_fallthru
          _
        // Predicated region
        $region45: #{tpu_custom_call.1} parent=35 // pred_check
          %p2611 = pneg %p183
        $region46: #{tpu_custom_call.1} parent=35 // pred_check_branch
          %2613 = sbr.rel (%p2611) target = $region48
        $region47: #{tpu_custom_call.1} parent=35 // pred_region
          %s2615 = ssub.s32 16, 16
          %2616 = vsyncadd %s2592, %s2615
          %s2617 = smul.addr %s24, 16
          %s2618 = scalar_lea.hbm %s6, %s2617
          %s2620 = sshll.u32 %s2594, 4
          %s2621 = int_to_ptr.vmem [resolvable:$true] %s2620
          %2623 = dma.vmem_to_hbm [thread:$0]  %s2621, 16, %s2618, %s2592
        $region48: #{tpu_custom_call.1} parent=35 // pred_fallthru
          _
      $region36: #{tpu_custom_call.1} parent=5 // pred_fallthru
        _
      %p2624 = scmp.le.s32.totalorder 2, %s19
      // Predicated region
      $region49: #{tpu_custom_call.1} parent=5 // pred_check
        %p2625 = pneg %p2624
      $region50: #{tpu_custom_call.1} parent=5 // pred_check_branch
        %2627 = sbr.rel (%p2625) target = $region52
      $region51: #{tpu_custom_call.1} parent=5 // pred_region
        %s2628 = ssub.s32 %s19, 2
        // Predicated region
        $region53: #{tpu_custom_call.1} parent=51 // pred_check
          %p2629 = pneg %p137
        $region54: #{tpu_custom_call.1} parent=51 // pred_check_branch
          %2631 = sbr.rel (%p2629) target = $region56
        $region55: #{tpu_custom_call.1} parent=51 // pred_region
          %p2632 = scmp.lt.s32.totalorder %s25, 1
          %s2633 = scalar_select %p2632, %s25, 1
          %s2634 = smul.addr %s2633, 32
          %s2635 = smul.addr %s2634, 8
          %s2636 = scalar_lea.vmem %s4, %s2635
        $region56: #{tpu_custom_call.1} parent=51 // pred_fallthru
          _
        // Predicated region
        $region57: #{tpu_custom_call.1} parent=51 // pred_check
          %p2637 = pneg %p163
        $region58: #{tpu_custom_call.1} parent=51 // pred_check_branch
          %2639 = sbr.rel (%p2637) target = $region60
        $region59: #{tpu_custom_call.1} parent=51 // pred_region
          %s2640 = sand.u32 %s148, 1
          %s2641 = scalar_lea.sflag [#allocation4], %s2640
          %s2642 = sand.u32 %s148, 1
          %s2643 = scalar_lea.vmem [#allocation3], %s2642
          %2644 = dma.done %s2641, 16
        $region60: #{tpu_custom_call.1} parent=51 // pred_fallthru
          _
        // Predicated region
        $region61: #{tpu_custom_call.1} parent=51 // pred_check
          %p2645 = pneg %p189
        $region62: #{tpu_custom_call.1} parent=51 // pred_check_branch
          %2647 = sbr.rel (%p2645) target = $region64
        $region63: #{tpu_custom_call.1} parent=51 // pred_region
          %s2648 = sand.u32 %s174, 1
          %s2649 = scalar_lea.sflag [#allocation6], %s2648
          %s2650 = sand.u32 %s174, 1
          %s2651 = scalar_lea.vmem [#allocation5], %s2650
          %2652 = dma.done %s2649, 16
        $region64: #{tpu_custom_call.1} parent=51 // pred_fallthru
          _
      $region52: #{tpu_custom_call.1} parent=5 // pred_fallthru
        _
    $region6: #{tpu_custom_call.1} parent=1 // loop_footer
      %s23 = sadd.s32 1, %s19
    $region7: #{tpu_custom_call.1} parent=1 // loop_footer_branch
      %18 = sbr.rel target = $region3
    $region8: #{tpu_custom_call.1} parent=1 // loop_exit
      _
    %2653 = vsyncpa [#allocation4], 1
    %s2654 = scalar_lea.sflag [#allocation4], 1
    %2655 = vsyncpa %s2654, 1
    %2656 = vsyncpa [#allocation6], 1
    %s2657 = scalar_lea.sflag [#allocation6], 1
    %2658 = vsyncpa %s2657, 1

</llo_original>
